<compile_context>
chip_gen: v5e
topology: v5e:2x2
jax: 0.10.0
libtpu: 0.0.40
codegen_flags: <defaults>
</compile_context>

<pallas_src>
import functools
import math

import jax
import jax.numpy as jnp
import numpy as np
from jax.experimental import pallas as pl
from jax.experimental.pallas import tpu as pltpu

_NEG_INF = -1e30


# ----------------------------------------------------------------------------
# Shared math (used identically by the Pallas kernel body and the pure-JAX ref)
# ----------------------------------------------------------------------------
def _layernorm(x, g, b, eps=1e-5):
    # PyTorch LayerNorm: biased variance, eps inside the sqrt.  f32 throughout.
    mu = jnp.mean(x, axis=-1, keepdims=True)
    xc = x - mu
    var = jnp.mean(xc * xc, axis=-1, keepdims=True)
    return xc * jax.lax.rsqrt(var + eps) * g + b


def _rope(x, cos_f, sin_a, sin_b, half):
    # Full-width rotary: out = x*COS + roll(x,-half)*SIN_A + roll(x,+half)*SIN_B
    # with per-head tiled tables (SIN_A/SIN_B are zero outside the rotary
    # region, so the circular wrap of the roll never contributes and the
    # roll never mixes heads where the tables are nonzero).
    xa = jnp.roll(x, -half, axis=-1)   # x[..., j + half]
    xb = jnp.roll(x, half, axis=-1)    # x[..., j - half]
    return x * cos_f + xa * sin_a + xb * sin_b


def _block_math(x, cos_f, sin_a, sin_b, g1, b1, wqkv, wo, g2, b2, wup, wdown,
                *, n_heads, head_dim, approx_recip):
    # One transformer block on a single batch element.  x: (L, D) f32.
    L, D = x.shape
    half = head_dim // 4
    bf16 = jnp.bfloat16
    f32 = jnp.float32

    # --- self attention -----------------------------------------------------
    h = _layernorm(x, g1, b1)
    qkv = jnp.dot(h.astype(bf16), wqkv, preferred_element_type=f32)  # (L, 3D)
    q = _rope(qkv[:, :D], cos_f, sin_a, sin_b, half)
    k = _rope(qkv[:, D:2 * D], cos_f, sin_a, sin_b, half)
    v = qkv[:, 2 * D:]

    def split_heads(t):  # (L, D) -> (H, L, head_dim), slices + major-dim stack
        return jnp.stack(
            [t[:, hh * head_dim:(hh + 1) * head_dim] for hh in range(n_heads)],
            axis=0)

    scale = 1.0 / math.sqrt(head_dim)
    qh = (split_heads(q) * scale).astype(bf16)     # fold softmax scale into q
    kh = split_heads(k).astype(bf16)
    vh = split_heads(v).astype(bf16)

    s = jnp.einsum('hqd,hkd->hqk', qh, kh,
                   preferred_element_type=f32)                     # (H, L, L)
    rows = jax.lax.broadcasted_iota(jnp.int32, (1, L, L), 1)
    cols = jax.lax.broadcasted_iota(jnp.int32, (1, L, L), 2)
    s = jnp.where(rows >= cols, s, _NEG_INF)
    s = s - jnp.max(s, axis=-1, keepdims=True)
    p = jnp.exp(s)
    denom = jnp.sum(p, axis=-1, keepdims=True)                     # (H, L, 1)
    attn = jnp.einsum('hqk,hkd->hqd', p.astype(bf16), vh,
                      preferred_element_type=f32)                  # (H, L, hd)
    if approx_recip:
        attn = attn * pl.reciprocal(denom, approx=True)
    else:
        attn = attn / denom
    attn2d = jnp.concatenate([attn[hh] for hh in range(n_heads)], axis=-1)
    x = x + jnp.dot(attn2d.astype(bf16), wo, preferred_element_type=f32)

    # --- feed forward (SwiGLU) ----------------------------------------------
    h2 = _layernorm(x, g2, b2)
    u = jnp.dot(h2.astype(bf16), wup, preferred_element_type=f32)  # (L, 2*Hd)
    hd2 = u.shape[-1] // 2
    a, gate = u[:, :hd2], u[:, hd2:]
    ff = a * (gate * jax.nn.sigmoid(gate))                         # x * silu(g)
    x = x + jnp.dot(ff.astype(bf16), wdown, preferred_element_type=f32)
    return x


# ----------------------------------------------------------------------------
# Pallas kernels
# ----------------------------------------------------------------------------
def _blocks_kernel(x_ref, cosf_ref, sina_ref, sinb_ref,
                   g1_ref, b1_ref, wqkv_ref, wo_ref,
                   g2_ref, b2_ref, wup_ref, wdown_ref,
                   o_ref, *, n_heads, head_dim):
    # grid = (batch, depth); depth is innermost.  o_ref holds the residual and
    # stays resident in VMEM across the whole depth loop of one batch element.
    @pl.when(pl.program_id(1) == 0)
    def _():
        o_ref[...] = x_ref[...]

    x = o_ref[0]                                   # (L, D) f32 residual
    y = _block_math(x, cosf_ref[...], sina_ref[...], sinb_ref[...],
                    g1_ref[0], b1_ref[0], wqkv_ref[0], wo_ref[0],
                    g2_ref[0], b2_ref[0], wup_ref[0], wdown_ref[0],
                    n_heads=n_heads, head_dim=head_dim, approx_recip=True)
    o_ref[0] = y


def _final_kernel(x_ref, g_ref, b_ref, w_ref, o_ref):
    h = _layernorm(x_ref[0], g_ref[...], b_ref[...])
    o_ref[0] = jnp.dot(h.astype(jnp.bfloat16), w_ref[...],
                       preferred_element_type=jnp.float32)


# ----------------------------------------------------------------------------
# Rotary tables
# ----------------------------------------------------------------------------
def make_axial_pos(h, w):
    h_pos = jnp.linspace(-1.0, 1.0, h + 1)
    w_pos = jnp.linspace(-1.0, 1.0, w + 1)
    h_pos = (h_pos[:-1] + h_pos[1:]) / 2
    w_pos = (w_pos[:-1] + w_pos[1:]) / 2
    gh, gw = jnp.meshgrid(h_pos, w_pos, indexing='ij')
    return jnp.stack([gh, gw], axis=-1).reshape(h * w, 2)


def make_rotary_tables(head_dim):
    log_min = math.log(math.pi)
    log_max = math.log(10 * math.pi)
    freqs = jnp.exp(jnp.linspace(log_min, log_max, head_dim // 8 + 1)[:-1])
    pos = jnp.concatenate([jnp.zeros((1, 2)), make_axial_pos(32, 32)], axis=0)
    theta_h = pos[:, 0:1] * freqs
    theta_w = pos[:, 1:2] * freqs
    theta = jnp.concatenate([theta_h, theta_w], axis=-1)  # (1025, head_dim//4)
    return jnp.cos(theta), jnp.sin(theta)


def build_rope_tables(cos, sin, n_heads, head_dim):
    # Per-head layout: [cos | cos | 1...], [-sin | 0 | 0...], [0 | sin | 0...],
    # tiled across heads -> (L, D) tables consumed by _rope.
    L, half = cos.shape
    pad = head_dim - 2 * half
    zeros_h = jnp.zeros((L, half), jnp.float32)
    zeros_p = jnp.zeros((L, pad), jnp.float32)
    ones_p = jnp.ones((L, pad), jnp.float32)
    cos_f = jnp.concatenate([cos, cos, ones_p], axis=-1)
    sin_a = jnp.concatenate([-sin, zeros_h, zeros_p], axis=-1)
    sin_b = jnp.concatenate([zeros_h, sin, zeros_p], axis=-1)
    rep = lambda t: jnp.tile(t.astype(jnp.float32), (1, n_heads))
    return rep(cos_f), rep(sin_a), rep(sin_b)


# ----------------------------------------------------------------------------
# Parameter construction (deterministic, synthetic)
# ----------------------------------------------------------------------------
def init_params(key, depth, dim, hidden_dim, head_dim, vocab_size):
    # NOTE: the original module zero-inits attn.out_proj and ff.down; small
    # random weights are used here so the kernel exercises real compute.
    # Matmul weights are stored in bf16 (f32 accumulation happens on the MXU).
    def nrm(k, shape, dtype, scale=0.02):
        return (jax.random.normal(k, shape, dtype=jnp.float32) * scale).astype(dtype)

    k_img, k_cls, k_voc, *k_blk = jax.random.split(key, 3 + 4 * depth)
    cos, sin = make_rotary_tables(head_dim)
    params = {
        'image_embed': nrm(k_img, (vocab_size, dim), jnp.float32),
        'class_embed': nrm(k_cls, (10, dim), jnp.float32),
        'out_norm_g': jnp.ones((1, dim), jnp.float32),
        'out_norm_b': jnp.zeros((1, dim), jnp.float32),
        'w_vocab': nrm(k_voc, (dim, vocab_size), jnp.bfloat16),
        'cos': cos, 'sin': sin,
        # Per-layer weights stacked along a leading depth axis so a single
        # pallas_call can iterate layers on a grid axis (auto prefetch of
        # layer l+1 weights during layer l compute).
        'g1': jnp.ones((depth, 1, dim), jnp.float32),
        'b1': jnp.zeros((depth, 1, dim), jnp.float32),
        'g2': jnp.ones((depth, 1, dim), jnp.float32),
        'b2': jnp.zeros((depth, 1, dim), jnp.float32),
        'wqkv': jnp.stack([nrm(k_blk[4 * i + 0], (dim, 3 * dim), jnp.bfloat16)
                           for i in range(depth)]),
        'wo': jnp.stack([nrm(k_blk[4 * i + 1], (dim, dim), jnp.bfloat16)
                         for i in range(depth)]),
        'wup': jnp.stack([nrm(k_blk[4 * i + 2], (dim, 2 * hidden_dim), jnp.bfloat16)
                          for i in range(depth)]),
        'wdown': jnp.stack([nrm(k_blk[4 * i + 3], (hidden_dim, dim), jnp.bfloat16)
                            for i in range(depth)]),
    }
    return params


# ----------------------------------------------------------------------------
# Full forward (Pallas) and pure-JAX reference
# ----------------------------------------------------------------------------
def transformer_forward(x_tokens, y_labels, params, *, n_heads, head_dim):
    x = jnp.take(params['image_embed'], x_tokens, axis=0)        # (B, S, D)
    y = jnp.take(params['class_embed'], y_labels, axis=0)        # (B, D)
    x = jnp.concatenate([y[:, None, :], x], axis=1).astype(jnp.float32)
    # embed_drop = nn.Dropout(0.1): identity in eval mode.
    B, L, D = x.shape
    cos_f, sin_a, sin_b = build_rope_tables(params['cos'][:L], params['sin'][:L],
                                            n_heads, head_dim)
    depth = params['wqkv'].shape[0]
    hidden = params['wdown'].shape[1]

    kernel = functools.partial(_blocks_kernel, n_heads=n_heads, head_dim=head_dim)
    act_spec = pl.BlockSpec((1, L, D), lambda b, l: (b, 0, 0))
    tbl_spec = pl.BlockSpec((L, D), lambda b, l: (0, 0))
    ln_spec = pl.BlockSpec((1, 1, D), lambda b, l: (l, 0, 0))

    def w_spec(kd, nd):
        return pl.BlockSpec((1, kd, nd), lambda b, l: (l, 0, 0))

    x = pl.pallas_call(
        kernel,
        grid=(B, depth),
        out_shape=jax.ShapeDtypeStruct((B, L, D), jnp.float32),
        in_specs=[act_spec, tbl_spec, tbl_spec, tbl_spec,
                  ln_spec, ln_spec, w_spec(D, 3 * D), w_spec(D, D),
                  ln_spec, ln_spec, w_spec(D, 2 * hidden), w_spec(hidden, D)],
        out_specs=act_spec,
        input_output_aliases={0: 0},          # residual written over input x
        compiler_params=pltpu.CompilerParams(
            dimension_semantics=("parallel", "arbitrary")),
    )(x, cos_f, sin_a, sin_b,
      params['g1'], params['b1'], params['wqkv'], params['wo'],
      params['g2'], params['b2'], params['wup'], params['wdown'])

    V = params['w_vocab'].shape[-1]
    logits = pl.pallas_call(
        _final_kernel,
        grid=(B,),
        out_shape=jax.ShapeDtypeStruct((B, L, V), jnp.float32),
        in_specs=[pl.BlockSpec((1, L, D), lambda b: (b, 0, 0)),
                  pl.BlockSpec((1, D), lambda b: (0, 0)),
                  pl.BlockSpec((1, D), lambda b: (0, 0)),
                  pl.BlockSpec((D, V), lambda b: (0, 0))],
        out_specs=pl.BlockSpec((1, L, V), lambda b: (b, 0, 0)),
        compiler_params=pltpu.CompilerParams(
            dimension_semantics=("parallel",)),
    )(x, params['out_norm_g'], params['out_norm_b'], params['w_vocab'])
    return logits


def reference_forward(x_tokens, y_labels, params, *, n_heads, head_dim):
    x = jnp.take(params['image_embed'], x_tokens, axis=0)
    y = jnp.take(params['class_embed'], y_labels, axis=0)
    x = jnp.concatenate([y[:, None, :], x], axis=1).astype(jnp.float32)
    B, L, D = x.shape
    cos_f, sin_a, sin_b = build_rope_tables(params['cos'][:L], params['sin'][:L],
                                            n_heads, head_dim)
    depth = params['wqkv'].shape[0]
    for l in range(depth):
        x = jnp.stack([
            _block_math(x[b], cos_f, sin_a, sin_b,
                        params['g1'][l], params['b1'][l],
                        params['wqkv'][l], params['wo'][l],
                        params['g2'][l], params['b2'][l],
                        params['wup'][l], params['wdown'][l],
                        n_heads=n_heads, head_dim=head_dim, approx_recip=False)
            for b in range(B)])
    h = _layernorm(x, params['out_norm_g'], params['out_norm_b'])
    return jnp.dot(h.astype(jnp.bfloat16), params['w_vocab'],
                   preferred_element_type=jnp.float32)


if __name__ == "__main__":
    depth, dim, hidden_dim, head_dim, vocab_size = 2, 32, 64, 16, 256
    n_heads = dim // head_dim
    batch, seq = 2, 8

    key = jax.random.PRNGKey(0)
    kp, kx, ky = jax.random.split(key, 3)
    params = init_params(kp, depth, dim, hidden_dim, head_dim, vocab_size)
    x_tokens = jax.random.randint(kx, (batch, seq), 0, vocab_size, dtype=jnp.int32)
    y_labels = jax.random.randint(ky, (batch,), 0, 10, dtype=jnp.int32)

    fwd = jax.jit(functools.partial(transformer_forward,
                                    n_heads=n_heads, head_dim=head_dim))
    logits = jax.block_until_ready(fwd(x_tokens, y_labels, params))
    assert logits.shape == (batch, seq + 1, vocab_size)

    ref = reference_forward(x_tokens, y_labels, params,
                            n_heads=n_heads, head_dim=head_dim)
    np.testing.assert_allclose(np.asarray(logits), np.asarray(ref),
                               rtol=2e-2, atol=2e-3)
    print("KERNEL_OK")
</pallas_src>

<mosaic_0001>
module attributes {stable_mosaic.version = 11 : i64} {
  func.func @_final_kernel(%arg0: i32, %arg1: memref<1x9x32xf32, #tpu.memory_space<vmem>>, %arg2: memref<1x32xf32, #tpu.memory_space<vmem>>, %arg3: memref<1x32xf32, #tpu.memory_space<vmem>>, %arg4: memref<32x256xbf16, #tpu.memory_space<vmem>>, %arg5: memref<1x9x256xf32, #tpu.memory_space<vmem>>) attributes {dimension_semantics = [#tpu.dimension_semantics<parallel>], iteration_bounds = array<i64: 2>, scalar_prefetch = 0 : i64, scratch_operands = 0 : i64, tpu.core_type = #tpu.core_type<tc>, window_params = [{transform_indices = @transform_0, window_bounds = array<i64: 1, 9, 32>}, {pipeline_mode = #tpu.pipeline_mode<synchronous>, transform_indices = @transform_1, window_bounds = array<i64: 1, 32>}, {pipeline_mode = #tpu.pipeline_mode<synchronous>, transform_indices = @transform_2, window_bounds = array<i64: 1, 32>}, {pipeline_mode = #tpu.pipeline_mode<synchronous>, transform_indices = @transform_3, window_bounds = array<i64: 32, 256>}, {transform_indices = @transform_4, window_bounds = array<i64: 1, 9, 256>}]} {
    %c0 = arith.constant 0 : index
    %c0_0 = arith.constant 0 : index
    %c0_1 = arith.constant 0 : index
    %0 = vector.load %arg1[%c0, %c0_0, %c0_1] : memref<1x9x32xf32, #tpu.memory_space<vmem>>, vector<1x9x32xf32>
    %1 = vector.shape_cast %0 : vector<1x9x32xf32> to vector<9x32xf32>
    %c0_2 = arith.constant 0 : index
    %c0_3 = arith.constant 0 : index
    %2 = vector.load %arg2[%c0_2, %c0_3] : memref<1x32xf32, #tpu.memory_space<vmem>>, vector<1x32xf32>
    %c0_4 = arith.constant 0 : index
    %c0_5 = arith.constant 0 : index
    %3 = vector.load %arg3[%c0_4, %c0_5] : memref<1x32xf32, #tpu.memory_space<vmem>>, vector<1x32xf32>
    %cst = arith.constant dense<0.000000e+00> : vector<9xf32>
    %4 = vector.multi_reduction <add>, %1, %cst [1] : vector<9x32xf32> to vector<9xf32>
    %5 = vector.shape_cast %4 : vector<9xf32> to vector<9x1xf32>
    %cst_6 = arith.constant 3.200000e+01 : f32
    %6 = vector.broadcast %cst_6 : f32 to vector<9x1xf32>
    %7 = arith.divf %5, %6 : vector<9x1xf32>
    %8 = vector.broadcast %7 : vector<9x1xf32> to vector<9x32xf32>
    %9 = arith.subf %1, %8 : vector<9x32xf32>
    %10 = arith.mulf %9, %9 : vector<9x32xf32>
    %cst_7 = arith.constant dense<0.000000e+00> : vector<9xf32>
    %11 = vector.multi_reduction <add>, %10, %cst_7 [1] : vector<9x32xf32> to vector<9xf32>
    %12 = vector.shape_cast %11 : vector<9xf32> to vector<9x1xf32>
    %cst_8 = arith.constant 3.200000e+01 : f32
    %13 = vector.broadcast %cst_8 : f32 to vector<9x1xf32>
    %14 = arith.divf %12, %13 : vector<9x1xf32>
    %cst_9 = arith.constant 9.99999974E-6 : f32
    %15 = vector.broadcast %cst_9 : f32 to vector<9x1xf32>
    %16 = arith.addf %14, %15 : vector<9x1xf32>
    %17 = math.rsqrt %16 : vector<9x1xf32>
    %18 = vector.broadcast %17 : vector<9x1xf32> to vector<9x32xf32>
    %19 = arith.mulf %9, %18 : vector<9x32xf32>
    %20 = vector.broadcast %2 : vector<1x32xf32> to vector<9x32xf32>
    %21 = arith.mulf %19, %20 : vector<9x32xf32>
    %22 = vector.broadcast %3 : vector<1x32xf32> to vector<9x32xf32>
    %23 = arith.addf %21, %22 : vector<9x32xf32>
    %24 = arith.truncf %23 : vector<9x32xf32> to vector<9x32xbf16>
    %c0_10 = arith.constant 0 : index
    %c0_11 = arith.constant 0 : index
    %25 = vector.load %arg4[%c0_10, %c0_11] : memref<32x256xbf16, #tpu.memory_space<vmem>>, vector<32x256xbf16>
    %cst_12 = arith.constant dense<0.000000e+00> : vector<9x256xf32>
    %26 = tpu.matmul %24, %25, %cst_12 {dimension_numbers = #tpu.dot_dimension_numbers<[1], [0], [0], [1], [0, 0, 1, 1], [], []>} : vector<9x32xbf16>, vector<32x256xbf16>, vector<9x256xf32> -> vector<9x256xf32>
    %c0_13 = arith.constant 0 : index
    %c0_14 = arith.constant 0 : index
    %c0_15 = arith.constant 0 : index
    %27 = vector.load %arg5[%c0_13, %c0_14, %c0_15] : memref<1x9x256xf32, #tpu.memory_space<vmem>>, vector<1x9x256xf32>
    %28 = vector.shape_cast %27 : vector<1x9x256xf32> to vector<9x256xf32>
    %29 = vector.shape_cast %26 : vector<9x256xf32> to vector<1x9x256xf32>
    tpu.vector_store %arg5[%c0_13, %c0_14, %c0_15], %29 {strides = array<i32>} : memref<1x9x256xf32, #tpu.memory_space<vmem>>, vector<1x9x256xf32>,
    return
  }
  func.func @transform_0(%arg0: i32) -> (i32, i32, i32) {
    %c0_i32 = arith.constant 0 : i32
    %c0_i32_0 = arith.constant 0 : i32
    %c0_i32_1 = arith.constant 0 : i32
    return %arg0, %c0_i32, %c0_i32_0 : i32, i32, i32
  }
  func.func @transform_1(%arg0: i32) -> (i32, i32) {
    %c0_i32 = arith.constant 0 : i32
    %c0_i32_0 = arith.constant 0 : i32
    %c0_i32_1 = arith.constant 0 : i32
    return %c0_i32, %c0_i32_0 : i32, i32
  }
  func.func @transform_2(%arg0: i32) -> (i32, i32) {
    %c0_i32 = arith.constant 0 : i32
    %c0_i32_0 = arith.constant 0 : i32
    %c0_i32_1 = arith.constant 0 : i32
    return %c0_i32, %c0_i32_0 : i32, i32
  }
  func.func @transform_3(%arg0: i32) -> (i32, i32) {
    %c0_i32 = arith.constant 0 : i32
    %c0_i32_0 = arith.constant 0 : i32
    %c0_i32_1 = arith.constant 0 : i32
    return %c0_i32, %c0_i32_0 : i32, i32
  }
  func.func @transform_4(%arg0: i32) -> (i32, i32, i32) {
    %c0_i32 = arith.constant 0 : i32
    %c0_i32_0 = arith.constant 0 : i32
    %c0_i32_1 = arith.constant 0 : i32
    return %arg0, %c0_i32, %c0_i32_0 : i32, i32, i32
  }
}

module attributes {stable_mosaic.version = 11 : i64} {
  func.func @_blocks_kernel(%arg0: i32, %arg1: i32, %arg2: memref<1x9x32xf32, #tpu.memory_space<vmem>>, %arg3: memref<9x32xf32, #tpu.memory_space<vmem>>, %arg4: memref<9x32xf32, #tpu.memory_space<vmem>>, %arg5: memref<9x32xf32, #tpu.memory_space<vmem>>, %arg6: memref<1x1x32xf32, #tpu.memory_space<vmem>>, %arg7: memref<1x1x32xf32, #tpu.memory_space<vmem>>, %arg8: memref<1x32x96xbf16, #tpu.memory_space<vmem>>, %arg9: memref<1x32x32xbf16, #tpu.memory_space<vmem>>, %arg10: memref<1x1x32xf32, #tpu.memory_space<vmem>>, %arg11: memref<1x1x32xf32, #tpu.memory_space<vmem>>, %arg12: memref<1x32x128xbf16, #tpu.memory_space<vmem>>, %arg13: memref<1x64x32xbf16, #tpu.memory_space<vmem>>, %arg14: memref<1x9x32xf32, #tpu.memory_space<vmem>>) attributes {dimension_semantics = [#tpu.dimension_semantics<parallel>, #tpu.dimension_semantics<arbitrary>], iteration_bounds = array<i64: 2, 2>, scalar_prefetch = 0 : i64, scratch_operands = 0 : i64, tpu.core_type = #tpu.core_type<tc>, window_params = [{transform_indices = @transform_0, window_bounds = array<i64: 1, 9, 32>}, {pipeline_mode = #tpu.pipeline_mode<synchronous>, transform_indices = @transform_1, window_bounds = array<i64: 9, 32>}, {pipeline_mode = #tpu.pipeline_mode<synchronous>, transform_indices = @transform_2, window_bounds = array<i64: 9, 32>}, {pipeline_mode = #tpu.pipeline_mode<synchronous>, transform_indices = @transform_3, window_bounds = array<i64: 9, 32>}, {transform_indices = @transform_4, window_bounds = array<i64: 1, 1, 32>}, {transform_indices = @transform_5, window_bounds = array<i64: 1, 1, 32>}, {transform_indices = @transform_6, window_bounds = array<i64: 1, 32, 96>}, {transform_indices = @transform_7, window_bounds = array<i64: 1, 32, 32>}, {transform_indices = @transform_8, window_bounds = array<i64: 1, 1, 32>}, {transform_indices = @transform_9, window_bounds = array<i64: 1, 1, 32>}, {transform_indices = @transform_10, window_bounds = array<i64: 1, 32, 128>}, {transform_indices = @transform_11, window_bounds = array<i64: 1, 64, 32>}, {transform_indices = @transform_12, window_bounds = array<i64: 1, 9, 32>}]} {
    %c0_i32 = arith.constant 0 : i32
    %0 = arith.cmpi eq, %arg1, %c0_i32 : i32
    %1 = arith.extui %0 : i1 to i32
    %c0_i32_0 = arith.constant 0 : i32
    %2 = arith.cmpi ne, %1, %c0_i32_0 : i32
    scf.if %2 {
      %c0_56 = arith.constant 0 : index
      %c0_57 = arith.constant 0 : index
      %c0_58 = arith.constant 0 : index
      %156 = vector.load %arg2[%c0_56, %c0_57, %c0_58] : memref<1x9x32xf32, #tpu.memory_space<vmem>>, vector<1x9x32xf32>
      %c0_59 = arith.constant 0 : index
      %c0_60 = arith.constant 0 : index
      %c0_61 = arith.constant 0 : index
      %157 = vector.load %arg14[%c0_59, %c0_60, %c0_61] : memref<1x9x32xf32, #tpu.memory_space<vmem>>, vector<1x9x32xf32>
      tpu.vector_store %arg14[%c0_59, %c0_60, %c0_61], %156 {strides = array<i32>} : memref<1x9x32xf32, #tpu.memory_space<vmem>>, vector<1x9x32xf32>,
    } else {
    }
    %c0 = arith.constant 0 : index
    %c0_1 = arith.constant 0 : index
    %c0_2 = arith.constant 0 : index
    %3 = vector.load %arg14[%c0, %c0_1, %c0_2] : memref<1x9x32xf32, #tpu.memory_space<vmem>>, vector<1x9x32xf32>
    %4 = vector.shape_cast %3 : vector<1x9x32xf32> to vector<9x32xf32>
    %c0_3 = arith.constant 0 : index
    %c0_4 = arith.constant 0 : index
    %5 = vector.load %arg3[%c0_3, %c0_4] : memref<9x32xf32, #tpu.memory_space<vmem>>, vector<9x32xf32>
    %c0_5 = arith.constant 0 : index
    %c0_6 = arith.constant 0 : index
    %6 = vector.load %arg4[%c0_5, %c0_6] : memref<9x32xf32, #tpu.memory_space<vmem>>, vector<9x32xf32>
    %c0_7 = arith.constant 0 : index
    %c0_8 = arith.constant 0 : index
    %7 = vector.load %arg5[%c0_7, %c0_8] : memref<9x32xf32, #tpu.memory_space<vmem>>, vector<9x32xf32>
    %c0_9 = arith.constant 0 : index
    %c0_10 = arith.constant 0 : index
    %c0_11 = arith.constant 0 : index
    %8 = vector.load %arg6[%c0_9, %c0_10, %c0_11] : memref<1x1x32xf32, #tpu.memory_space<vmem>>, vector<1x1x32xf32>
    %9 = vector.shape_cast %8 : vector<1x1x32xf32> to vector<1x32xf32>
    %c0_12 = arith.constant 0 : index
    %c0_13 = arith.constant 0 : index
    %c0_14 = arith.constant 0 : index
    %10 = vector.load %arg7[%c0_12, %c0_13, %c0_14] : memref<1x1x32xf32, #tpu.memory_space<vmem>>, vector<1x1x32xf32>
    %11 = vector.shape_cast %10 : vector<1x1x32xf32> to vector<1x32xf32>
    %c0_15 = arith.constant 0 : index
    %c0_16 = arith.constant 0 : index
    %c0_17 = arith.constant 0 : index
    %12 = vector.load %arg8[%c0_15, %c0_16, %c0_17] : memref<1x32x96xbf16, #tpu.memory_space<vmem>>, vector<1x32x96xbf16>
    %13 = vector.shape_cast %12 : vector<1x32x96xbf16> to vector<32x96xbf16>
    %c0_18 = arith.constant 0 : index
    %c0_19 = arith.constant 0 : index
    %c0_20 = arith.constant 0 : index
    %14 = vector.load %arg9[%c0_18, %c0_19, %c0_20] : memref<1x32x32xbf16, #tpu.memory_space<vmem>>, vector<1x32x32xbf16>
    %15 = vector.shape_cast %14 : vector<1x32x32xbf16> to vector<32x32xbf16>
    %c0_21 = arith.constant 0 : index
    %c0_22 = arith.constant 0 : index
    %c0_23 = arith.constant 0 : index
    %16 = vector.load %arg10[%c0_21, %c0_22, %c0_23] : memref<1x1x32xf32, #tpu.memory_space<vmem>>, vector<1x1x32xf32>
    %17 = vector.shape_cast %16 : vector<1x1x32xf32> to vector<1x32xf32>
    %c0_24 = arith.constant 0 : index
    %c0_25 = arith.constant 0 : index
    %c0_26 = arith.constant 0 : index
    %18 = vector.load %arg11[%c0_24, %c0_25, %c0_26] : memref<1x1x32xf32, #tpu.memory_space<vmem>>, vector<1x1x32xf32>
    %19 = vector.shape_cast %18 : vector<1x1x32xf32> to vector<1x32xf32>
    %c0_27 = arith.constant 0 : index
    %c0_28 = arith.constant 0 : index
    %c0_29 = arith.constant 0 : index
    %20 = vector.load %arg12[%c0_27, %c0_28, %c0_29] : memref<1x32x128xbf16, #tpu.memory_space<vmem>>, vector<1x32x128xbf16>
    %21 = vector.shape_cast %20 : vector<1x32x128xbf16> to vector<32x128xbf16>
    %c0_30 = arith.constant 0 : index
    %c0_31 = arith.constant 0 : index
    %c0_32 = arith.constant 0 : index
    %22 = vector.load %arg13[%c0_30, %c0_31, %c0_32] : memref<1x64x32xbf16, #tpu.memory_space<vmem>>, vector<1x64x32xbf16>
    %23 = vector.shape_cast %22 : vector<1x64x32xbf16> to vector<64x32xbf16>
    %cst = arith.constant dense<0.000000e+00> : vector<9xf32>
    %24 = vector.multi_reduction <add>, %4, %cst [1] : vector<9x32xf32> to vector<9xf32>
    %25 = vector.shape_cast %24 : vector<9xf32> to vector<9x1xf32>
    %cst_33 = arith.constant 3.200000e+01 : f32
    %26 = vector.broadcast %cst_33 : f32 to vector<9x1xf32>
    %27 = arith.divf %25, %26 : vector<9x1xf32>
    %28 = vector.broadcast %27 : vector<9x1xf32> to vector<9x32xf32>
    %29 = arith.subf %4, %28 : vector<9x32xf32>
    %30 = arith.mulf %29, %29 : vector<9x32xf32>
    %cst_34 = arith.constant dense<0.000000e+00> : vector<9xf32>
    %31 = vector.multi_reduction <add>, %30, %cst_34 [1] : vector<9x32xf32> to vector<9xf32>
    %32 = vector.shape_cast %31 : vector<9xf32> to vector<9x1xf32>
    %cst_35 = arith.constant 3.200000e+01 : f32
    %33 = vector.broadcast %cst_35 : f32 to vector<9x1xf32>
    %34 = arith.divf %32, %33 : vector<9x1xf32>
    %cst_36 = arith.constant 9.99999974E-6 : f32
    %35 = vector.broadcast %cst_36 : f32 to vector<9x1xf32>
    %36 = arith.addf %34, %35 : vector<9x1xf32>
    %37 = math.rsqrt %36 : vector<9x1xf32>
    %38 = vector.broadcast %37 : vector<9x1xf32> to vector<9x32xf32>
    %39 = arith.mulf %29, %38 : vector<9x32xf32>
    %40 = vector.broadcast %9 : vector<1x32xf32> to vector<9x32xf32>
    %41 = arith.mulf %39, %40 : vector<9x32xf32>
    %42 = vector.broadcast %11 : vector<1x32xf32> to vector<9x32xf32>
    %43 = arith.addf %41, %42 : vector<9x32xf32>
    %44 = arith.truncf %43 : vector<9x32xf32> to vector<9x32xbf16>
    %cst_37 = arith.constant dense<0.000000e+00> : vector<9x96xf32>
    %45 = tpu.matmul %44, %13, %cst_37 {dimension_numbers = #tpu.dot_dimension_numbers<[1], [0], [0], [1], [0, 0, 1, 1], [], []>} : vector<9x32xbf16>, vector<32x96xbf16>, vector<9x96xf32> -> vector<9x96xf32>
    %46 = vector.extract_strided_slice %45 {offsets = [0, 0], sizes = [9, 32], strides = [1, 1]} : vector<9x96xf32> to vector<9x32xf32>
    %47 = vector.extract_strided_slice %46 {offsets = [0, 4], sizes = [9, 28], strides = [1, 1]} : vector<9x32xf32> to vector<9x28xf32>
    %48 = vector.extract_strided_slice %46 {offsets = [0, 0], sizes = [9, 4], strides = [1, 1]} : vector<9x32xf32> to vector<9x4xf32>
    %49 = tpu.concatenate %47, %48 in 1 : vector<9x28xf32>, vector<9x4xf32> -> vector<9x32xf32>
    %50 = vector.extract_strided_slice %46 {offsets = [0, 28], sizes = [9, 4], strides = [1, 1]} : vector<9x32xf32> to vector<9x4xf32>
    %51 = vector.extract_strided_slice %46 {offsets = [0, 0], sizes = [9, 28], strides = [1, 1]} : vector<9x32xf32> to vector<9x28xf32>
    %52 = tpu.concatenate %50, %51 in 1 : vector<9x4xf32>, vector<9x28xf32> -> vector<9x32xf32>
    %53 = arith.mulf %46, %5 : vector<9x32xf32>
    %54 = arith.mulf %49, %6 : vector<9x32xf32>
    %55 = arith.addf %53, %54 : vector<9x32xf32>
    %56 = arith.mulf %52, %7 : vector<9x32xf32>
    %57 = arith.addf %55, %56 : vector<9x32xf32>
    %58 = vector.extract_strided_slice %45 {offsets = [0, 32], sizes = [9, 32], strides = [1, 1]} : vector<9x96xf32> to vector<9x32xf32>
    %59 = vector.extract_strided_slice %58 {offsets = [0, 4], sizes = [9, 28], strides = [1, 1]} : vector<9x32xf32> to vector<9x28xf32>
    %60 = vector.extract_strided_slice %58 {offsets = [0, 0], sizes = [9, 4], strides = [1, 1]} : vector<9x32xf32> to vector<9x4xf32>
    %61 = tpu.concatenate %59, %60 in 1 : vector<9x28xf32>, vector<9x4xf32> -> vector<9x32xf32>
    %62 = vector.extract_strided_slice %58 {offsets = [0, 28], sizes = [9, 4], strides = [1, 1]} : vector<9x32xf32> to vector<9x4xf32>
    %63 = vector.extract_strided_slice %58 {offsets = [0, 0], sizes = [9, 28], strides = [1, 1]} : vector<9x32xf32> to vector<9x28xf32>
    %64 = tpu.concatenate %62, %63 in 1 : vector<9x4xf32>, vector<9x28xf32> -> vector<9x32xf32>
    %65 = arith.mulf %58, %5 : vector<9x32xf32>
    %66 = arith.mulf %61, %6 : vector<9x32xf32>
    %67 = arith.addf %65, %66 : vector<9x32xf32>
    %68 = arith.mulf %64, %7 : vector<9x32xf32>
    %69 = arith.addf %67, %68 : vector<9x32xf32>
    %70 = vector.extract_strided_slice %45 {offsets = [0, 64], sizes = [9, 32], strides = [1, 1]} : vector<9x96xf32> to vector<9x32xf32>
    %71 = vector.extract_strided_slice %57 {offsets = [0, 0], sizes = [9, 16], strides = [1, 1]} : vector<9x32xf32> to vector<9x16xf32>
    %72 = vector.extract_strided_slice %57 {offsets = [0, 16], sizes = [9, 16], strides = [1, 1]} : vector<9x32xf32> to vector<9x16xf32>
    %73 = vector.shape_cast %71 : vector<9x16xf32> to vector<1x9x16xf32>
    %74 = vector.shape_cast %72 : vector<9x16xf32> to vector<1x9x16xf32>
    %75 = tpu.concatenate %73, %74 in 0 : vector<1x9x16xf32>, vector<1x9x16xf32> -> vector<2x9x16xf32>
    %cst_38 = arith.constant 2.500000e-01 : f32
    %76 = vector.broadcast %cst_38 : f32 to vector<2x9x16xf32>
    %77 = arith.mulf %75, %76 : vector<2x9x16xf32>
    %78 = arith.truncf %77 : vector<2x9x16xf32> to vector<2x9x16xbf16>
    %79 = vector.extract_strided_slice %69 {offsets = [0, 0], sizes = [9, 16], strides = [1, 1]} : vector<9x32xf32> to vector<9x16xf32>
    %80 = vector.extract_strided_slice %69 {offsets = [0, 16], sizes = [9, 16], strides = [1, 1]} : vector<9x32xf32> to vector<9x16xf32>
    %81 = vector.shape_cast %79 : vector<9x16xf32> to vector<1x9x16xf32>
    %82 = vector.shape_cast %80 : vector<9x16xf32> to vector<1x9x16xf32>
    %83 = tpu.concatenate %81, %82 in 0 : vector<1x9x16xf32>, vector<1x9x16xf32> -> vector<2x9x16xf32>
    %84 = arith.truncf %83 : vector<2x9x16xf32> to vector<2x9x16xbf16>
    %85 = vector.extract_strided_slice %70 {offsets = [0, 0], sizes = [9, 16], strides = [1, 1]} : vector<9x32xf32> to vector<9x16xf32>
    %86 = vector.extract_strided_slice %70 {offsets = [0, 16], sizes = [9, 16], strides = [1, 1]} : vector<9x32xf32> to vector<9x16xf32>
    %87 = vector.shape_cast %85 : vector<9x16xf32> to vector<1x9x16xf32>
    %88 = vector.shape_cast %86 : vector<9x16xf32> to vector<1x9x16xf32>
    %89 = tpu.concatenate %87, %88 in 0 : vector<1x9x16xf32>, vector<1x9x16xf32> -> vector<2x9x16xf32>
    %90 = arith.truncf %89 : vector<2x9x16xf32> to vector<2x9x16xbf16>
    "tpu.trace_start"() <{level = 10 : i32, message = "hqd,hkd->hqk"}> : () -> ()
    %cst_39 = arith.constant dense<0.000000e+00> : vector<2x9x9xf32>
    %91 = tpu.matmul %78, %84, %cst_39 {dimension_numbers = #tpu.dot_dimension_numbers<[2], [2], [1], [1], [0, 0, 0, 1, 1, 1], [0], [0]>} : vector<2x9x16xbf16>, vector<2x9x16xbf16>, vector<2x9x9xf32> -> vector<2x9x9xf32>
    "tpu.trace_stop"() : () -> ()
    %92 = tpu.iota {dimensions = array<i32: 1>} : vector<1x9x9xi32>
    %93 = tpu.iota {dimensions = array<i32: 2>} : vector<1x9x9xi32>
    %94 = arith.cmpi sge, %92, %93 : vector<1x9x9xi32>
    %cst_40 = arith.constant -1.000000e+30 : f32
    %95 = vector.shape_cast %94 : vector<1x9x9xi1> to vector<1x9x9xi1>
    %96 = vector.broadcast %95 : vector<1x9x9xi1> to vector<2x9x9xi1>
    %97 = vector.broadcast %cst_40 : f32 to vector<2x9x9xf32>
    %98 = arith.select %96, %91, %97 : vector<2x9x9xi1>, vector<2x9x9xf32>
    %cst_41 = arith.constant dense<0xFF800000> : vector<2x9xf32>
    %99 = vector.multi_reduction <maximumf>, %98, %cst_41 [2] : vector<2x9x9xf32> to vector<2x9xf32>
    %100 = vector.shape_cast %99 : vector<2x9xf32> to vector<2x9x1xf32>
    %101 = vector.broadcast %100 : vector<2x9x1xf32> to vector<2x9x9xf32>
    %102 = arith.subf %98, %101 : vector<2x9x9xf32>
    %103 = math.exp %102 : vector<2x9x9xf32>
    %cst_42 = arith.constant dense<0.000000e+00> : vector<2x9xf32>
    %104 = vector.multi_reduction <add>, %103, %cst_42 [2] : vector<2x9x9xf32> to vector<2x9xf32>
    %105 = vector.shape_cast %104 : vector<2x9xf32> to vector<2x9x1xf32>
    %106 = arith.truncf %103 : vector<2x9x9xf32> to vector<2x9x9xbf16>
    "tpu.trace_start"() <{level = 10 : i32, message = "hqk,hkd->hqd"}> : () -> ()
    %cst_43 = arith.constant dense<0.000000e+00> : vector<2x9x16xf32>
    %107 = tpu.matmul %106, %90, %cst_43 {dimension_numbers = #tpu.dot_dimension_numbers<[2], [1], [1], [2], [0, 0, 0, 1, 1, 2], [0], [0]>} : vector<2x9x9xbf16>, vector<2x9x16xbf16>, vector<2x9x16xf32> -> vector<2x9x16xf32>
    "tpu.trace_stop"() : () -> ()
    %108 = tpu.reciprocal %105 {approx = true} : vector<2x9x1xf32> -> vector<2x9x1xf32>
    %109 = vector.broadcast %108 : vector<2x9x1xf32> to vector<2x9x16xf32>
    %110 = arith.mulf %107, %109 : vector<2x9x16xf32>
    %111 = vector.extract_strided_slice %110 {offsets = [0, 0, 0], sizes = [1, 9, 16], strides = [1, 1, 1]} : vector<2x9x16xf32> to vector<1x9x16xf32>
    %112 = vector.shape_cast %111 : vector<1x9x16xf32> to vector<9x16xf32>
    %113 = vector.extract_strided_slice %110 {offsets = [1, 0, 0], sizes = [1, 9, 16], strides = [1, 1, 1]} : vector<2x9x16xf32> to vector<1x9x16xf32>
    %114 = vector.shape_cast %113 : vector<1x9x16xf32> to vector<9x16xf32>
    %115 = tpu.concatenate %112, %114 in 1 : vector<9x16xf32>, vector<9x16xf32> -> vector<9x32xf32>
    %116 = arith.truncf %115 : vector<9x32xf32> to vector<9x32xbf16>
    %cst_44 = arith.constant dense<0.000000e+00> : vector<9x32xf32>
    %117 = tpu.matmul %116, %15, %cst_44 {dimension_numbers = #tpu.dot_dimension_numbers<[1], [0], [0], [1], [0, 0, 1, 1], [], []>} : vector<9x32xbf16>, vector<32x32xbf16>, vector<9x32xf32> -> vector<9x32xf32>
    %118 = arith.addf %4, %117 : vector<9x32xf32>
    %cst_45 = arith.constant dense<0.000000e+00> : vector<9xf32>
    %119 = vector.multi_reduction <add>, %118, %cst_45 [1] : vector<9x32xf32> to vector<9xf32>
    %120 = vector.shape_cast %119 : vector<9xf32> to vector<9x1xf32>
    %cst_46 = arith.constant 3.200000e+01 : f32
    %121 = vector.broadcast %cst_46 : f32 to vector<9x1xf32>
    %122 = arith.divf %120, %121 : vector<9x1xf32>
    %123 = vector.broadcast %122 : vector<9x1xf32> to vector<9x32xf32>
    %124 = arith.subf %118, %123 : vector<9x32xf32>
    %125 = arith.mulf %124, %124 : vector<9x32xf32>
    %cst_47 = arith.constant dense<0.000000e+00> : vector<9xf32>
    %126 = vector.multi_reduction <add>, %125, %cst_47 [1] : vector<9x32xf32> to vector<9xf32>
    %127 = vector.shape_cast %126 : vector<9xf32> to vector<9x1xf32>
    %cst_48 = arith.constant 3.200000e+01 : f32
    %128 = vector.broadcast %cst_48 : f32 to vector<9x1xf32>
    %129 = arith.divf %127, %128 : vector<9x1xf32>
    %cst_49 = arith.constant 9.99999974E-6 : f32
    %130 = vector.broadcast %cst_49 : f32 to vector<9x1xf32>
    %131 = arith.addf %129, %130 : vector<9x1xf32>
    %132 = math.rsqrt %131 : vector<9x1xf32>
    %133 = vector.broadcast %132 : vector<9x1xf32> to vector<9x32xf32>
    %134 = arith.mulf %124, %133 : vector<9x32xf32>
    %135 = vector.broadcast %17 : vector<1x32xf32> to vector<9x32xf32>
    %136 = arith.mulf %134, %135 : vector<9x32xf32>
    %137 = vector.broadcast %19 : vector<1x32xf32> to vector<9x32xf32>
    %138 = arith.addf %136, %137 : vector<9x32xf32>
    %139 = arith.truncf %138 : vector<9x32xf32> to vector<9x32xbf16>
    %cst_50 = arith.constant dense<0.000000e+00> : vector<9x128xf32>
    %140 = tpu.matmul %139, %21, %cst_50 {dimension_numbers = #tpu.dot_dimension_numbers<[1], [0], [0], [1], [0, 0, 1, 1], [], []>} : vector<9x32xbf16>, vector<32x128xbf16>, vector<9x128xf32> -> vector<9x128xf32>
    %141 = vector.extract_strided_slice %140 {offsets = [0, 0], sizes = [9, 64], strides = [1, 1]} : vector<9x128xf32> to vector<9x64xf32>
    %142 = vector.extract_strided_slice %140 {offsets = [0, 64], sizes = [9, 64], strides = [1, 1]} : vector<9x128xf32> to vector<9x64xf32>
    %143 = arith.negf %142 : vector<9x64xf32>
    %144 = math.exp %143 : vector<9x64xf32>
    %cst_51 = arith.constant 1.000000e+00 : f32
    %145 = vector.broadcast %cst_51 : f32 to vector<9x64xf32>
    %146 = arith.addf %145, %144 : vector<9x64xf32>
    %147 = arith.divf %145, %146 : vector<9x64xf32>
    %148 = arith.mulf %142, %147 : vector<9x64xf32>
    %149 = arith.mulf %141, %148 : vector<9x64xf32>
    %150 = arith.truncf %149 : vector<9x64xf32> to vector<9x64xbf16>
    %cst_52 = arith.constant dense<0.000000e+00> : vector<9x32xf32>
    %151 = tpu.matmul %150, %23, %cst_52 {dimension_numbers = #tpu.dot_dimension_numbers<[1], [0], [0], [1], [0, 0, 1, 1], [], []>} : vector<9x64xbf16>, vector<64x32xbf16>, vector<9x32xf32> -> vector<9x32xf32>
    %152 = arith.addf %118, %151 : vector<9x32xf32>
    %c0_53 = arith.constant 0 : index
    %c0_54 = arith.constant 0 : index
    %c0_55 = arith.constant 0 : index
    %153 = vector.load %arg14[%c0_53, %c0_54, %c0_55] : memref<1x9x32xf32, #tpu.memory_space<vmem>>, vector<1x9x32xf32>
    %154 = vector.shape_cast %153 : vector<1x9x32xf32> to vector<9x32xf32>
    %155 = vector.shape_cast %152 : vector<9x32xf32> to vector<1x9x32xf32>
    tpu.vector_store %arg14[%c0_53, %c0_54, %c0_55], %155 {strides = array<i32>} : memref<1x9x32xf32, #tpu.memory_space<vmem>>, vector<1x9x32xf32>,
    return
  }
  func.func @transform_0(%arg0: i32, %arg1: i32) -> (i32, i32, i32) {
    %c0_i32 = arith.constant 0 : i32
    %c0_i32_0 = arith.constant 0 : i32
    %c0_i32_1 = arith.constant 0 : i32
    return %arg0, %c0_i32, %c0_i32_0 : i32, i32, i32
  }
  func.func @transform_1(%arg0: i32, %arg1: i32) -> (i32, i32) {
    %c0_i32 = arith.constant 0 : i32
    %c0_i32_0 = arith.constant 0 : i32
    %c0_i32_1 = arith.constant 0 : i32
    return %c0_i32, %c0_i32_0 : i32, i32
  }
  func.func @transform_2(%arg0: i32, %arg1: i32) -> (i32, i32) {
    %c0_i32 = arith.constant 0 : i32
    %c0_i32_0 = arith.constant 0 : i32
    %c0_i32_1 = arith.constant 0 : i32
    return %c0_i32, %c0_i32_0 : i32, i32
  }
  func.func @transform_3(%arg0: i32, %arg1: i32) -> (i32, i32) {
    %c0_i32 = arith.constant 0 : i32
    %c0_i32_0 = arith.constant 0 : i32
    %c0_i32_1 = arith.constant 0 : i32
    return %c0_i32, %c0_i32_0 : i32, i32
  }
  func.func @transform_4(%arg0: i32, %arg1: i32) -> (i32, i32, i32) {
    %c0_i32 = arith.constant 0 : i32
    %c0_i32_0 = arith.constant 0 : i32
    %c0_i32_1 = arith.constant 0 : i32
    return %arg1, %c0_i32, %c0_i32_0 : i32, i32, i32
  }
  func.func @transform_5(%arg0: i32, %arg1: i32) -> (i32, i32, i32) {
    %c0_i32 = arith.constant 0 : i32
    %c0_i32_0 = arith.constant 0 : i32
    %c0_i32_1 = arith.constant 0 : i32
    return %arg1, %c0_i32, %c0_i32_0 : i32, i32, i32
  }
  func.func @transform_6(%arg0: i32, %arg1: i32) -> (i32, i32, i32) {
    %c0_i32 = arith.constant 0 : i32
    %c0_i32_0 = arith.constant 0 : i32
    %c0_i32_1 = arith.constant 0 : i32
    return %arg1, %c0_i32, %c0_i32_0 : i32, i32, i32
  }
  func.func @transform_7(%arg0: i32, %arg1: i32) -> (i32, i32, i32) {
    %c0_i32 = arith.constant 0 : i32
    %c0_i32_0 = arith.constant 0 : i32
    %c0_i32_1 = arith.constant 0 : i32
    return %arg1, %c0_i32, %c0_i32_0 : i32, i32, i32
  }
  func.func @transform_8(%arg0: i32, %arg1: i32) -> (i32, i32, i32) {
    %c0_i32 = arith.constant 0 : i32
    %c0_i32_0 = arith.constant 0 : i32
    %c0_i32_1 = arith.constant 0 : i32
    return %arg1, %c0_i32, %c0_i32_0 : i32, i32, i32
  }
  func.func @transform_9(%arg0: i32, %arg1: i32) -> (i32, i32, i32) {
    %c0_i32 = arith.constant 0 : i32
    %c0_i32_0 = arith.constant 0 : i32
    %c0_i32_1 = arith.constant 0 : i32
    return %arg1, %c0_i32, %c0_i32_0 : i32, i32, i32
  }
  func.func @transform_10(%arg0: i32, %arg1: i32) -> (i32, i32, i32) {
    %c0_i32 = arith.constant 0 : i32
    %c0_i32_0 = arith.constant 0 : i32
    %c0_i32_1 = arith.constant 0 : i32
    return %arg1, %c0_i32, %c0_i32_0 : i32, i32, i32
  }
  func.func @transform_11(%arg0: i32, %arg1: i32) -> (i32, i32, i32) {
    %c0_i32 = arith.constant 0 : i32
    %c0_i32_0 = arith.constant 0 : i32
    %c0_i32_1 = arith.constant 0 : i32
    return %arg1, %c0_i32, %c0_i32_0 : i32, i32, i32
  }
  func.func @transform_12(%arg0: i32, %arg1: i32) -> (i32, i32, i32) {
    %c0_i32 = arith.constant 0 : i32
    %c0_i32_0 = arith.constant 0 : i32
    %c0_i32_1 = arith.constant 0 : i32
    return %arg0, %c0_i32, %c0_i32_0 : i32, i32, i32
  }
}

</mosaic_0001>

<llo_original>
// kernel: tile.19
$region0: #{tile.19}
  %s0 = inlined_call_operand.vmem [shape: f32[9,2,16], index: 0, kind: input, shape index: {}]
  %s1 = inlined_call_operand.vmem [shape: f32[9,32], index: 1, kind: output, shape index: {}]
  $region1: #{tile.19} parent=0
    #allocation0 [shape = 'u8[36864]{0}', space=vmem, size = 0x9000, scoped, tag = 'scoped mem for input reshape']
    %s3 = ssub.s32 4, 1
    %s4 = scalar_lea.vmem %s0, 16
    %v5 = vld [vmem:[%s4] sm:%s3]
    %s6 = scalar_lea.vmem [#allocation0], 64
    %7 = vst [vmem:[%s6] sm:%s3] %v5
    %s8 = scalar_lea.vmem %s0, 14
    %v9 = vld [vmem:[%s8] sm:%s3]
    %s10 = scalar_lea.vmem [#allocation0], 56
    %11 = vst [vmem:[%s10] sm:%s3] %v9
    %s12 = scalar_lea.vmem %s0, 12
    %v13 = vld [vmem:[%s12] sm:%s3]
    %s14 = scalar_lea.vmem [#allocation0], 48
    %15 = vst [vmem:[%s14] sm:%s3] %v13
    %s16 = scalar_lea.vmem %s0, 10
    %v17 = vld [vmem:[%s16] sm:%s3]
    %s18 = scalar_lea.vmem [#allocation0], 40
    %19 = vst [vmem:[%s18] sm:%s3] %v17
    %s20 = scalar_lea.vmem %s0, 8
    %v21 = vld [vmem:[%s20] sm:%s3]
    %s22 = scalar_lea.vmem [#allocation0], 32
    %23 = vst [vmem:[%s22] sm:%s3] %v21
    %s24 = scalar_lea.vmem %s0, 6
    %v25 = vld [vmem:[%s24] sm:%s3]
    %s26 = scalar_lea.vmem [#allocation0], 24
    %27 = vst [vmem:[%s26] sm:%s3] %v25
    %s28 = scalar_lea.vmem %s0, 4
    %v29 = vld [vmem:[%s28] sm:%s3]
    %s30 = scalar_lea.vmem [#allocation0], 16
    %31 = vst [vmem:[%s30] sm:%s3] %v29
    %s32 = scalar_lea.vmem %s0, 2
    %v33 = vld [vmem:[%s32] sm:%s3]
    %s34 = scalar_lea.vmem [#allocation0], 8
    %35 = vst [vmem:[%s34] sm:%s3] %v33
    %v36 = vld [vmem:[%s0] sm:%s3]
    %37 = vst [vmem:[#allocation0] sm:%s3] %v36
    %v38 = vld [vmem:[#allocation0] ss:$8 sm:$0xf]
    %v39 = vld [vmem:[#allocation0] ss:$8 sm:$0xf0]
    %vm40 = vcmask 1047556
    %v41 = vsel %vm40, %v39, %v38
    %vm42 = vcmask 130048
    %43 = vst.msk [vmem:[%s1] sm:$0xff] %vm42, %v41
    %s44 = scalar_lea.vmem [#allocation0], 64
    %v45 = vld [vmem:[%s44] sm:$0x1]
    %vm46 = vcmask 130048
    %s47 = scalar_lea.vmem %s1, 8
    %48 = vst.msk [vmem:[%s47] sm:$0x1] %vm46, %v45
    %s49 = scalar_lea.vmem [#allocation0], 1
    %v50 = vld [vmem:[%s49] ss:$8 sm:$0xf]
    %s51 = scalar_lea.vmem [#allocation0], 1
    %v52 = vld [vmem:[%s51] ss:$8 sm:$0xf0]
    %vm53 = vcmask 1047556
    %v54 = vsel %vm53, %v52, %v50
    %55 = vrot.lane.b32.xlu0 %v54, 16
    %v56 = vpop.permute.xlu0 %55
    %vm57 = vcmask 261248
    %58 = vst.msk [vmem:[%s1] sm:$0xff] %vm57, %v56
    %s59 = scalar_lea.vmem [#allocation0], 65
    %v60 = vld [vmem:[%s59] sm:$0x1]
    %61 = vrot.lane.b32.xlu0 %v60, 16
    %v62 = vpop.permute.xlu0 %61
    %vm63 = vcmask 261248
    %s64 = scalar_lea.vmem %s1, 8
    %65 = vst.msk [vmem:[%s64] sm:$0x1] %vm63, %v62

// kernel: transformer_forward.3
$region0: #{transformer_forward.3}
  #allocation0 [shape = 'u32[]', space=smem, size = 0x4, offset = 0x4, fixed_abs, tag = 'smem constant byte address 0x4 - core index']
  #allocation1 [shape = 'u32[72,128]{1,0:T(1,128)}', space=vmem, size = 0x9000, scoped, tag = 'internal scratch']
  %s0 = inlined_call_operand.vmem [shape: f32[2,9,32], index: 0, kind: input, shape index: {}]
  %s1 = inlined_call_operand.vmem [shape: f32[1,32], index: 1, kind: input, shape index: {}]
  %s2 = inlined_call_operand.vmem [shape: f32[1,32], index: 2, kind: input, shape index: {}]
  %s3 = inlined_call_operand.vmem [shape: bf16[32,256], index: 3, kind: input, shape index: {}]
  %s4 = inlined_call_operand.vmem [shape: f32[2,9,256], index: 4, kind: output, shape index: {}]
  %s5 = sld [smem:[#allocation0]]
  $region49: #{transformer_forward.3} parent=0
    _
  %s7 = ssub.s32 1, %s5
  %s8 = scalar_select 0, %s7, %s5
  loop: start=0, step=1, limit=4
  $region2: #{transformer_forward.3} parent=0 // loop_pre_header
    _
  $region3: #{transformer_forward.3} parent=0 // loop_header
    %s10 = sphi 0, %s14
    %p11 = scmp.ge.s32.totalorder %s10, 4
    %s20 = sphi 0, %s22
    %s23 = sphi 0, %s20
    %s24 = sphi 0, %s23
    %s40 = sphi 0, %s24
    %s44 = sphi 0, %s44
    %s46 = sphi 0, %s44
    %s47 = sphi 0, %s46
    %s61 = sphi 0, %s47
    %s65 = sphi 0, %s65
    %s67 = sphi 0, %s65
    %s68 = sphi 0, %s67
    %s82 = sphi 0, %s68
    %s86 = sphi 0, %s86
    %s88 = sphi 0, %s86
    %s89 = sphi 0, %s88
    %s103 = sphi 0, %s89
    %s109 = sphi 0, %s111
    %s112 = sphi 0, %s109
    %s113 = sphi 0, %s112
    %s129 = sphi 0, %s113
  $region4: #{transformer_forward.3} parent=0 // loop_header_branch
    %13 = sbr.rel (%p11) target = $region8
  $region5: #{transformer_forward.3} parent=0 // loop_body
    %s15 = ssub.s32 %s10, 1
    %s16 = ssub.s32 %s10, 2
    %s17 = sadd.s32 %s10, 1
    %s18 = ssub.s32 %s10, %s17
    %p19 = scmp.eq.s32.totalorder %s18, 0
    %s21 = sadd.s32 %s20, 1
    %s22 = scalar_select %p19, %s20, %s21
    %p25 = pneg %p19
    %p26 = scmp.eq.s32.totalorder %s10, 1
    %p27 = por %p25, %p26
    %p28 = scmp.ne.s32.totalorder %s20, %s23
    %p29 = scmp.eq.s32.totalorder %s10, 0
    %p30 = por %p28, %p29
    %p31 = scmp.ne.s32.totalorder %s20, %s23
    %p32 = scmp.eq.s32.totalorder %s15, 1
    %p33 = por %p31, %p32
    %p34 = scmp.ne.s32.totalorder %s23, %s24
    %p35 = scmp.eq.s32.totalorder %s15, 0
    %p36 = por %p34, %p35
    %p37 = scmp.ne.s32.totalorder %s23, %s24
    %p38 = scmp.eq.s32.totalorder %s16, 1
    %p39 = por %p37, %p38
    %p41 = scmp.ne.s32.totalorder %s24, %s40
    %p42 = scmp.eq.s32.totalorder %s16, 0
    %p43 = por %p41, %p42
    %s45 = sadd.s32 %s44, 1
    %p48 = scmp.eq.s32.totalorder %s10, 1
    %p49 = scmp.ne.s32.totalorder %s44, %s46
    %p50 = scmp.eq.s32.totalorder %s10, 0
    %p51 = por %p49, %p50
    %p52 = scmp.ne.s32.totalorder %s44, %s46
    %p53 = scmp.eq.s32.totalorder %s15, 1
    %p54 = por %p52, %p53
    %p55 = scmp.ne.s32.totalorder %s46, %s47
    %p56 = scmp.eq.s32.totalorder %s15, 0
    %p57 = por %p55, %p56
    %p58 = scmp.ne.s32.totalorder %s46, %s47
    %p59 = scmp.eq.s32.totalorder %s16, 1
    %p60 = por %p58, %p59
    %p62 = scmp.ne.s32.totalorder %s47, %s61
    %p63 = scmp.eq.s32.totalorder %s16, 0
    %p64 = por %p62, %p63
    %s66 = sadd.s32 %s65, 1
    %p69 = scmp.eq.s32.totalorder %s10, 1
    %p70 = scmp.ne.s32.totalorder %s65, %s67
    %p71 = scmp.eq.s32.totalorder %s10, 0
    %p72 = por %p70, %p71
    %p73 = scmp.ne.s32.totalorder %s65, %s67
    %p74 = scmp.eq.s32.totalorder %s15, 1
    %p75 = por %p73, %p74
    %p76 = scmp.ne.s32.totalorder %s67, %s68
    %p77 = scmp.eq.s32.totalorder %s15, 0
    %p78 = por %p76, %p77
    %p79 = scmp.ne.s32.totalorder %s67, %s68
    %p80 = scmp.eq.s32.totalorder %s16, 1
    %p81 = por %p79, %p80
    %p83 = scmp.ne.s32.totalorder %s68, %s82
    %p84 = scmp.eq.s32.totalorder %s16, 0
    %p85 = por %p83, %p84
    %s87 = sadd.s32 %s86, 1
    %p90 = scmp.eq.s32.totalorder %s10, 1
    %p91 = scmp.ne.s32.totalorder %s86, %s88
    %p92 = scmp.eq.s32.totalorder %s10, 0
    %p93 = por %p91, %p92
    %p94 = scmp.ne.s32.totalorder %s86, %s88
    %p95 = scmp.eq.s32.totalorder %s15, 1
    %p96 = por %p94, %p95
    %p97 = scmp.ne.s32.totalorder %s88, %s89
    %p98 = scmp.eq.s32.totalorder %s15, 0
    %p99 = por %p97, %p98
    %p100 = scmp.ne.s32.totalorder %s88, %s89
    %p101 = scmp.eq.s32.totalorder %s16, 1
    %p102 = por %p100, %p101
    %p104 = scmp.ne.s32.totalorder %s89, %s103
    %p105 = scmp.eq.s32.totalorder %s16, 0
    %p106 = por %p104, %p105
    %s107 = ssub.s32 %s10, %s17
    %p108 = scmp.eq.s32.totalorder %s107, 0
    %s110 = sadd.s32 %s109, 1
    %s111 = scalar_select %p108, %s109, %s110
    %p114 = pneg %p108
    %p115 = scmp.eq.s32.totalorder %s10, 1
    %p116 = por %p114, %p115
    %p117 = scmp.ne.s32.totalorder %s109, %s112
    %p118 = scmp.eq.s32.totalorder %s10, 0
    %p119 = por %p117, %p118
    %p120 = scmp.ne.s32.totalorder %s109, %s112
    %p121 = scmp.eq.s32.totalorder %s15, 1
    %p122 = por %p120, %p121
    %p123 = scmp.ne.s32.totalorder %s112, %s113
    %p124 = scmp.eq.s32.totalorder %s15, 0
    %p125 = por %p123, %p124
    %p126 = scmp.ne.s32.totalorder %s112, %s113
    %p127 = scmp.eq.s32.totalorder %s16, 1
    %p128 = por %p126, %p127
    %p130 = scmp.ne.s32.totalorder %s113, %s129
    %p131 = scmp.eq.s32.totalorder %s16, 0
    %p132 = por %p130, %p131
    %p133 = scmp.le.s32.totalorder 1, %s10
    %p134 = scmp.lt.s32.totalorder %s10, 3
    %p135 = pnand %p133, %p134
    %p136 = pneg %p135
    // Predicated region
    $region9: #{transformer_forward.3} parent=5 // pred_check
      _
    $region10: #{transformer_forward.3} parent=5 // pred_check_branch
      %138 = sbr.rel (%p135) target = $region12
    $region11: #{transformer_forward.3} parent=5 // pred_region
      %s139 = ssub.s32 %s10, 1
      // Predicated region
      $region13: #{transformer_forward.3} parent=11 // pred_check
        %p140 = pneg %p57
      $region14: #{transformer_forward.3} parent=11 // pred_check_branch
        %142 = sbr.rel (%p140) target = $region16
      $region15: #{transformer_forward.3} parent=11 // pred_region
        _
      $region16: #{transformer_forward.3} parent=11 // pred_fallthru
        _
      // Predicated region
      $region17: #{transformer_forward.3} parent=11 // pred_check
        %p143 = pneg %p78
      $region18: #{transformer_forward.3} parent=11 // pred_check_branch
        %145 = sbr.rel (%p143) target = $region20
      $region19: #{transformer_forward.3} parent=11 // pred_region
        _
      $region20: #{transformer_forward.3} parent=11 // pred_fallthru
        _
      // Predicated region
      $region21: #{transformer_forward.3} parent=11 // pred_check
        %p146 = pneg %p99
      $region22: #{transformer_forward.3} parent=11 // pred_check_branch
        %148 = sbr.rel (%p146) target = $region24
      $region23: #{transformer_forward.3} parent=11 // pred_region
        _
      $region24: #{transformer_forward.3} parent=11 // pred_fallthru
        _
    $region12: #{transformer_forward.3} parent=5 // pred_fallthru
      _
    %p149 = scmp.lt.s32.totalorder %s10, 2
    // Predicated region
    $region25: #{transformer_forward.3} parent=5 // pred_check
      %p150 = pneg %p149
    $region26: #{transformer_forward.3} parent=5 // pred_check_branch
      %152 = sbr.rel (%p150) target = $region28
    $region27: #{transformer_forward.3} parent=5 // pred_region
      // Predicated region
      $region29: #{transformer_forward.3} parent=27 // pred_check
        %p153 = pneg %p30
      $region30: #{transformer_forward.3} parent=27 // pred_check_branch
        %155 = sbr.rel (%p153) target = $region32
      $region31: #{transformer_forward.3} parent=27 // pred_region
        %p156 = scmp.lt.s32.totalorder %s10, 1
        %s157 = scalar_select %p156, %s10, 1
        %s158 = smul.addr %s157, 2
        %s159 = smul.addr %s158, 8
        %s160 = scalar_lea.vmem %s0, %s159
      $region32: #{transformer_forward.3} parent=27 // pred_fallthru
        _
    $region28: #{transformer_forward.3} parent=5 // pred_fallthru
      _
    %p161 = scmp.le.s32.totalorder 1, %s10
    %p162 = scmp.lt.s32.totalorder %s10, 3
    %p163 = pnand %p161, %p162
    %p164 = pneg %p163
    // Predicated region
    $region33: #{transformer_forward.3} parent=5 // pred_check
      _
    $region34: #{transformer_forward.3} parent=5 // pred_check_branch
      %166 = sbr.rel (%p163) target = $region36
    $region35: #{transformer_forward.3} parent=5 // pred_region
      %s167 = ssub.s32 %s10, 1
      %p168 = scmp.lt.s32.totalorder %s15, 1
      %s169 = scalar_select %p168, %s15, 1
      %s170 = smul.addr %s169, 2
      %s171 = smul.addr %s170, 8
      %s172 = scalar_lea.vmem %s0, %s171
      %p173 = pneg %p36
      %p174 = pneg %p33
      %p175 = pneg %p57
      %p176 = pneg %p54
      %p177 = pneg %p78
      %p178 = pneg %p75
      %p179 = pneg %p99
      %p180 = pneg %p96
      %p181 = pneg %p125
      %p182 = pneg %p122
      %p183 = scmp.lt.s32.totalorder %s15, 1
      %s184 = scalar_select %p183, %s15, 1
      %s185 = smul.addr %s184, 4
      %s186 = smul.addr %s185, 8
      %s187 = scalar_lea.vmem %s4, %s186
      %p188 = scmp.lt.s32.totalorder %s15, 1
      %s189 = scalar_select %p188, %s15, 1
      %s190 = smul.addr %s189, 2
      %s191 = smul.addr %s190, 8
      %s192 = scalar_lea.vmem %s0, %s191
      %p193 = scmp.lt.s32.totalorder %s15, 1
      %s194 = scalar_select %p193, %s15, 1
      %s195 = smul.addr %s194, 4
      %s196 = smul.addr %s195, 8
      %s197 = scalar_lea.vmem %s4, %s196
      %v199 = vld [vmem:[%s192] sm:$0xff]
      %v200 = vld [vmem:[%s192 + $0x8] sm:$0x1]
      %v201 = vld [vmem:[%s1] sm:$0x1]
      %v202 = vld [vmem:[%s2] sm:$0x1]
      %vm203 = vcmask 261120
      %v204 = vsel %vm203, %v199, 0.0
      %205 = vadd.xlane.f32.xlu0 %v204
      %v206 = vpop.xlane.xlu0 %205
      %vm207 = vcmask 253952
      %v208 = vsel %vm207, %v200, 0.0
      %209 = vadd.xlane.f32.xlu0 %v208
      %v210 = vpop.xlane.xlu0 %209
      %v211 = vrcp.pop 32.0
      %v212 = vmul.f32 32.0, %v211
      %v213 = vsub.f32 1.0, %v212
      %v214 = vmul.f32 %v211, %v213
      %v215 = vadd.f32 %v211, %v214
      %vm216 = vweird.f32 %v211
      %v217 = vsel %vm216, %v211, %v215
      %v218 = vmul.f32 %v206, %v217
      %v219 = vmul.f32 %v210, %v217
      %v220 = vsub.f32 %v199, %v218
      %v221 = vsub.f32 %v200, %v219
      %v222 = vmul.f32 %v220, %v220
      %v223 = vmul.f32 %v221, %v221
      %v224 = vsel %vm203, %v222, 0.0
      %225 = vadd.xlane.f32.xlu0 %v224
      %v226 = vpop.xlane.xlu0 %225
      %v227 = vsel %vm207, %v223, 0.0
      %228 = vadd.xlane.f32.xlu0 %v227
      %v229 = vpop.xlane.xlu0 %228
      %v230 = vmul.f32 %v226, %v217
      %v231 = vmul.f32 %v229, %v217
      %v232 = vadd.f32 %v230, 1e-05
      %v233 = vadd.f32 %v231, 1e-05
      %v234 = vrsqrt.pop %v232
      %v235 = vmul.f32 %v234, %v232
      %v236 = vmul.f32 %v235, %v234
      %v237 = vmul.f32 0.5, %v236
      %v238 = vsub.f32 1.5, %v237
      %v239 = vmul.f32 %v234, %v238
      %vm240 = vweird.f32 %v232
      %vm241 = vweird.f32 %v234
      %vm242 = vmor %vm240, %vm241
      %v243 = vsel %vm242, %v234, %v239
      %v244 = vrsqrt.pop %v233
      %v245 = vmul.f32 %v244, %v233
      %v246 = vmul.f32 %v245, %v244
      %v247 = vmul.f32 0.5, %v246
      %v248 = vsub.f32 1.5, %v247
      %v249 = vmul.f32 %v244, %v248
      %vm250 = vweird.f32 %v233
      %vm251 = vweird.f32 %v244
      %vm252 = vmor %vm250, %vm251
      %v253 = vsel %vm252, %v244, %v249
      %v254 = vmul.f32 %v220, %v243
      %v255 = vmul.f32 %v221, %v253
      %v257 = vperm.slane %v201, 0
      %v259 = vmul.f32 %v254, %v257
      %v260 = vmul.f32 %v255, %v257
      %v262 = vperm.slane %v202, 0
      %v264 = vadd.f32 %v259, %v262
      %v265 = vadd.f32 %v260, %v262
      %v266 = vpack.c.bf16 %v265, %v264
      %v267 = vld [vmem:[%s3] sm:$0xff]
      %v268 = vld [vmem:[%s3 + $0x8] sm:$0xff]
      %v269 = vld [vmem:[%s3 + $0x10] sm:$0xff]
      %v270 = vld [vmem:[%s3 + $0x18] sm:$0xff]
      %v275 = vunpack.c.l.b16 %v267
      %v276 = vunpack.c.h.b16 %v267
      %v277 = vunpack.c.l.b16 %v268
      %v278 = vunpack.c.h.b16 %v268
      %v279 = vunpack.c.l.b16 %v269
      %v280 = vunpack.c.h.b16 %v269
      %v281 = vunpack.c.l.b16 %v270
      %v282 = vunpack.c.h.b16 %v270
      %v283 = vpack.c.b16 %v277, %v275
      %v284 = vpack.c.b16 %v278, %v276
      %v285 = vpack.c.b16 %v281, %v279
      %v286 = vpack.c.b16 %v282, %v280
      %v292 = vsel %vm203, %v266, 0
      %294 = vmatpush.bf16.msra.mxu0 0
      %295 = vmatpush.bf16.msra.mxu0 0
      %296 = vmatpush.bf16.msra.mxu0 0
      %297 = vmatpush.bf16.msra.mxu0 0
      %298 = vmatpush.bf16.msra.mxu0 0
      %299 = vmatpush.bf16.msra.mxu0 0
      %300 = vmatpush.bf16.msra.mxu0 %v285
      %301 = vmatpush.bf16.msra.mxu0 %v283
      %302 = vmatmul.bf16.gmra.mxu0 %v292
      %v303 = vpop.f32.mrf.mxu0
      %v304 = vadd.f32 0.0, %v303
      %v305 = vpop.f32.mrf.mxu0
      %v306 = vadd.f32 0.0, %v305
      %307 = vdwg.mxu0
      %308 = vmatpush.bf16.msra.mxu0 0
      %309 = vmatpush.bf16.msra.mxu0 0
      %310 = vmatpush.bf16.msra.mxu0 0
      %311 = vmatpush.bf16.msra.mxu0 0
      %312 = vmatpush.bf16.msra.mxu0 0
      %313 = vmatpush.bf16.msra.mxu0 0
      %314 = vmatpush.bf16.msra.mxu0 %v286
      %315 = vmatpush.bf16.msra.mxu0 %v284
      %316 = vmatmul.bf16.gmra.mxu0 %v292
      %v317 = vpop.f32.mrf.mxu0
      %v318 = vadd.f32 0.0, %v317
      %v319 = vpop.f32.mrf.mxu0
      %v320 = vadd.f32 0.0, %v319
      %321 = vdwg.mxu0
      %322 = vst [vmem:[%s197] sm:$0xff] %v304
      %323 = vst [vmem:[%s197 + $0x8] sm:$0xff] %v318
      %324 = vst [vmem:[%s197 + $0x10] sm:$0x1] %v306
      %325 = vst [vmem:[%s197 + $0x18] sm:$0x1] %v320
      %p326 = scmp.lt.s32.totalorder %s15, 1
      %s327 = scalar_select %p326, %s15, 1
      %s328 = smul.addr %s327, 4
      %s329 = smul.addr %s328, 8
      %s330 = scalar_lea.vmem %s4, %s329
      // Predicated region
      $region37: #{transformer_forward.3} parent=35 // pred_check
        %p331 = pneg %p122
      $region38: #{transformer_forward.3} parent=35 // pred_check_branch
        %333 = sbr.rel (%p331) target = $region40
      $region39: #{transformer_forward.3} parent=35 // pred_region
        _
      $region40: #{transformer_forward.3} parent=35 // pred_fallthru
        _
    $region36: #{transformer_forward.3} parent=5 // pred_fallthru
      _
    %p334 = scmp.le.s32.totalorder 2, %s10
    // Predicated region
    $region41: #{transformer_forward.3} parent=5 // pred_check
      %p335 = pneg %p334
    $region42: #{transformer_forward.3} parent=5 // pred_check_branch
      %337 = sbr.rel (%p335) target = $region44
    $region43: #{transformer_forward.3} parent=5 // pred_region
      %s338 = ssub.s32 %s10, 2
      // Predicated region
      $region45: #{transformer_forward.3} parent=43 // pred_check
        %p339 = pneg %p128
      $region46: #{transformer_forward.3} parent=43 // pred_check_branch
        %341 = sbr.rel (%p339) target = $region48
      $region47: #{transformer_forward.3} parent=43 // pred_region
        %p342 = scmp.lt.s32.totalorder %s16, 1
        %s343 = scalar_select %p342, %s16, 1
        %s344 = smul.addr %s343, 4
        %s345 = smul.addr %s344, 8
        %s346 = scalar_lea.vmem %s4, %s345
      $region48: #{transformer_forward.3} parent=43 // pred_fallthru
        _
    $region44: #{transformer_forward.3} parent=5 // pred_fallthru
      _
  $region6: #{transformer_forward.3} parent=0 // loop_footer
    %s14 = sadd.s32 1, %s10
  $region7: #{transformer_forward.3} parent=0 // loop_footer_branch
    %9 = sbr.rel target = $region3
  $region8: #{transformer_forward.3} parent=0 // loop_exit
    _

// kernel: transformer_forward.2
$region0: #{transformer_forward.2}
  #allocation0 [shape = 'u32[]', space=smem, size = 0x4, offset = 0x4, fixed_abs, tag = 'smem constant byte address 0x4 - core index']
  #allocation1 [shape = 'u32[72,128]{1,0:T(1,128)}', space=vmem, size = 0x9000, scoped, tag = 'internal scratch']
  %s0 = inlined_call_operand.vmem [shape: f32[2,9,32], index: 0, kind: input, shape index: {}, may-alias: {0,12}]
  %s1 = inlined_call_operand.vmem [shape: f32[9,32], index: 1, kind: input, shape index: {}]
  %s2 = inlined_call_operand.vmem [shape: f32[9,32], index: 2, kind: input, shape index: {}]
  %s3 = inlined_call_operand.vmem [shape: f32[9,32], index: 3, kind: input, shape index: {}]
  %s4 = inlined_call_operand.vmem [shape: f32[2,1,32], index: 4, kind: input, shape index: {}]
  %s5 = inlined_call_operand.vmem [shape: f32[2,1,32], index: 5, kind: input, shape index: {}]
  %s6 = inlined_call_operand.vmem [shape: bf16[2,32,96], index: 6, kind: input, shape index: {}]
  %s7 = inlined_call_operand.vmem [shape: bf16[2,32,32], index: 7, kind: input, shape index: {}]
  %s8 = inlined_call_operand.vmem [shape: f32[2,1,32], index: 8, kind: input, shape index: {}]
  %s9 = inlined_call_operand.vmem [shape: f32[2,1,32], index: 9, kind: input, shape index: {}]
  %s10 = inlined_call_operand.vmem [shape: bf16[2,32,128], index: 10, kind: input, shape index: {}]
  %s11 = inlined_call_operand.vmem [shape: bf16[2,64,32], index: 11, kind: input, shape index: {}]
  %s12 = inlined_call_operand.vmem [shape: f32[2,9,32], index: 12, kind: output, shape index: {}, may-alias: {0,12}]
  %s13 = sld [smem:[#allocation0]]
  $region85: #{transformer_forward.2} parent=0
    _
  %s15 = ssub.s32 1, %s13
  %s16 = scalar_select 0, %s15, %s13
  loop: start=0, step=1, limit=6
  $region2: #{transformer_forward.2} parent=0 // loop_pre_header
    _
  $region3: #{transformer_forward.2} parent=0 // loop_header
    %s18 = sphi 0, %s22
    %p19 = scmp.ge.s32.totalorder %s18, 6
    %s25 = sphi 0, %s37
    %s26 = sphi 0, %s33
    %s27 = sphi 0, %s25
    %s28 = sphi 0, %s26
    %s29 = sphi 0, %s27
    %s30 = sphi 0, %s28
    %s40 = sphi 0, %s42
    %s43 = sphi 0, %s40
    %s44 = sphi 0, %s43
    %s60 = sphi 0, %s44
    %s64 = sphi 0, %s64
    %s66 = sphi 0, %s64
    %s67 = sphi 0, %s66
    %s81 = sphi 0, %s67
    %s85 = sphi 0, %s85
    %s87 = sphi 0, %s85
    %s88 = sphi 0, %s87
    %s102 = sphi 0, %s88
    %s106 = sphi 0, %s106
    %s108 = sphi 0, %s106
    %s109 = sphi 0, %s108
    %s123 = sphi 0, %s109
    %s129 = sphi 0, %s131
    %s132 = sphi 0, %s129
    %s133 = sphi 0, %s132
    %s149 = sphi 0, %s133
    %s155 = sphi 0, %s157
    %s158 = sphi 0, %s155
    %s159 = sphi 0, %s158
    %s175 = sphi 0, %s159
    %s181 = sphi 0, %s183
    %s184 = sphi 0, %s181
    %s185 = sphi 0, %s184
    %s201 = sphi 0, %s185
    %s207 = sphi 0, %s209
    %s210 = sphi 0, %s207
    %s211 = sphi 0, %s210
    %s227 = sphi 0, %s211
    %s233 = sphi 0, %s235
    %s236 = sphi 0, %s233
    %s237 = sphi 0, %s236
    %s253 = sphi 0, %s237
    %s259 = sphi 0, %s261
    %s262 = sphi 0, %s259
    %s263 = sphi 0, %s262
    %s279 = sphi 0, %s263
    %s285 = sphi 0, %s287
    %s288 = sphi 0, %s285
    %s289 = sphi 0, %s288
    %s305 = sphi 0, %s289
    %s311 = sphi 0, %s313
    %s314 = sphi 0, %s311
    %s315 = sphi 0, %s314
    %s331 = sphi 0, %s315
    %s337 = sphi 0, %s339
    %s340 = sphi 0, %s337
    %s341 = sphi 0, %s340
    %s357 = sphi 0, %s341
  $region4: #{transformer_forward.2} parent=0 // loop_header_branch
    %21 = sbr.rel (%p19) target = $region8
  $region5: #{transformer_forward.2} parent=0 // loop_body
    %s23 = ssub.s32 %s18, 1
    %s24 = ssub.s32 %s18, 2
    %s31 = sadd.s32 1, %s26
    %p32 = scmp.ge.s32.totalorder %s31, 2
    %s33 = scalar_select %p32, 0, %s31
    %s34 = sadd.s32 1, %s25
    %s35 = scalar_select %p32, %s34, %s25
    %p36 = scmp.ge.s32.totalorder %s35, 2
    %s37 = scalar_select %p36, 0, %s35
    %s38 = ssub.s32 %s25, %s37
    %p39 = scmp.eq.s32.totalorder %s38, 0
    %s41 = sadd.s32 %s40, 1
    %s42 = scalar_select %p39, %s40, %s41
    %p45 = pneg %p39
    %p46 = scmp.eq.s32.totalorder %s18, 3
    %p47 = por %p45, %p46
    %p48 = scmp.ne.s32.totalorder %s40, %s43
    %p49 = scmp.eq.s32.totalorder %s18, 0
    %p50 = por %p48, %p49
    %p51 = scmp.ne.s32.totalorder %s40, %s43
    %p52 = scmp.eq.s32.totalorder %s23, 3
    %p53 = por %p51, %p52
    %p54 = scmp.ne.s32.totalorder %s43, %s44
    %p55 = scmp.eq.s32.totalorder %s23, 0
    %p56 = por %p54, %p55
    %p57 = scmp.ne.s32.totalorder %s43, %s44
    %p58 = scmp.eq.s32.totalorder %s24, 3
    %p59 = por %p57, %p58
    %p61 = scmp.ne.s32.totalorder %s44, %s60
    %p62 = scmp.eq.s32.totalorder %s24, 0
    %p63 = por %p61, %p62
    %s65 = sadd.s32 %s64, 1
    %p68 = scmp.eq.s32.totalorder %s18, 3
    %p69 = scmp.ne.s32.totalorder %s64, %s66
    %p70 = scmp.eq.s32.totalorder %s18, 0
    %p71 = por %p69, %p70
    %p72 = scmp.ne.s32.totalorder %s64, %s66
    %p73 = scmp.eq.s32.totalorder %s23, 3
    %p74 = por %p72, %p73
    %p75 = scmp.ne.s32.totalorder %s66, %s67
    %p76 = scmp.eq.s32.totalorder %s23, 0
    %p77 = por %p75, %p76
    %p78 = scmp.ne.s32.totalorder %s66, %s67
    %p79 = scmp.eq.s32.totalorder %s24, 3
    %p80 = por %p78, %p79
    %p82 = scmp.ne.s32.totalorder %s67, %s81
    %p83 = scmp.eq.s32.totalorder %s24, 0
    %p84 = por %p82, %p83
    %s86 = sadd.s32 %s85, 1
    %p89 = scmp.eq.s32.totalorder %s18, 3
    %p90 = scmp.ne.s32.totalorder %s85, %s87
    %p91 = scmp.eq.s32.totalorder %s18, 0
    %p92 = por %p90, %p91
    %p93 = scmp.ne.s32.totalorder %s85, %s87
    %p94 = scmp.eq.s32.totalorder %s23, 3
    %p95 = por %p93, %p94
    %p96 = scmp.ne.s32.totalorder %s87, %s88
    %p97 = scmp.eq.s32.totalorder %s23, 0
    %p98 = por %p96, %p97
    %p99 = scmp.ne.s32.totalorder %s87, %s88
    %p100 = scmp.eq.s32.totalorder %s24, 3
    %p101 = por %p99, %p100
    %p103 = scmp.ne.s32.totalorder %s88, %s102
    %p104 = scmp.eq.s32.totalorder %s24, 0
    %p105 = por %p103, %p104
    %s107 = sadd.s32 %s106, 1
    %p110 = scmp.eq.s32.totalorder %s18, 3
    %p111 = scmp.ne.s32.totalorder %s106, %s108
    %p112 = scmp.eq.s32.totalorder %s18, 0
    %p113 = por %p111, %p112
    %p114 = scmp.ne.s32.totalorder %s106, %s108
    %p115 = scmp.eq.s32.totalorder %s23, 3
    %p116 = por %p114, %p115
    %p117 = scmp.ne.s32.totalorder %s108, %s109
    %p118 = scmp.eq.s32.totalorder %s23, 0
    %p119 = por %p117, %p118
    %p120 = scmp.ne.s32.totalorder %s108, %s109
    %p121 = scmp.eq.s32.totalorder %s24, 3
    %p122 = por %p120, %p121
    %p124 = scmp.ne.s32.totalorder %s109, %s123
    %p125 = scmp.eq.s32.totalorder %s24, 0
    %p126 = por %p124, %p125
    %s127 = ssub.s32 %s26, %s33
    %p128 = scmp.eq.s32.totalorder %s127, 0
    %s130 = sadd.s32 %s129, 1
    %s131 = scalar_select %p128, %s129, %s130
    %p134 = pneg %p128
    %p135 = scmp.eq.s32.totalorder %s18, 3
    %p136 = por %p134, %p135
    %p137 = scmp.ne.s32.totalorder %s129, %s132
    %p138 = scmp.eq.s32.totalorder %s18, 0
    %p139 = por %p137, %p138
    %p140 = scmp.ne.s32.totalorder %s129, %s132
    %p141 = scmp.eq.s32.totalorder %s23, 3
    %p142 = por %p140, %p141
    %p143 = scmp.ne.s32.totalorder %s132, %s133
    %p144 = scmp.eq.s32.totalorder %s23, 0
    %p145 = por %p143, %p144
    %p146 = scmp.ne.s32.totalorder %s132, %s133
    %p147 = scmp.eq.s32.totalorder %s24, 3
    %p148 = por %p146, %p147
    %p150 = scmp.ne.s32.totalorder %s133, %s149
    %p151 = scmp.eq.s32.totalorder %s24, 0
    %p152 = por %p150, %p151
    %s153 = ssub.s32 %s26, %s33
    %p154 = scmp.eq.s32.totalorder %s153, 0
    %s156 = sadd.s32 %s155, 1
    %s157 = scalar_select %p154, %s155, %s156
    %p160 = pneg %p154
    %p161 = scmp.eq.s32.totalorder %s18, 3
    %p162 = por %p160, %p161
    %p163 = scmp.ne.s32.totalorder %s155, %s158
    %p164 = scmp.eq.s32.totalorder %s18, 0
    %p165 = por %p163, %p164
    %p166 = scmp.ne.s32.totalorder %s155, %s158
    %p167 = scmp.eq.s32.totalorder %s23, 3
    %p168 = por %p166, %p167
    %p169 = scmp.ne.s32.totalorder %s158, %s159
    %p170 = scmp.eq.s32.totalorder %s23, 0
    %p171 = por %p169, %p170
    %p172 = scmp.ne.s32.totalorder %s158, %s159
    %p173 = scmp.eq.s32.totalorder %s24, 3
    %p174 = por %p172, %p173
    %p176 = scmp.ne.s32.totalorder %s159, %s175
    %p177 = scmp.eq.s32.totalorder %s24, 0
    %p178 = por %p176, %p177
    %s179 = ssub.s32 %s26, %s33
    %p180 = scmp.eq.s32.totalorder %s179, 0
    %s182 = sadd.s32 %s181, 1
    %s183 = scalar_select %p180, %s181, %s182
    %p186 = pneg %p180
    %p187 = scmp.eq.s32.totalorder %s18, 3
    %p188 = por %p186, %p187
    %p189 = scmp.ne.s32.totalorder %s181, %s184
    %p190 = scmp.eq.s32.totalorder %s18, 0
    %p191 = por %p189, %p190
    %p192 = scmp.ne.s32.totalorder %s181, %s184
    %p193 = scmp.eq.s32.totalorder %s23, 3
    %p194 = por %p192, %p193
    %p195 = scmp.ne.s32.totalorder %s184, %s185
    %p196 = scmp.eq.s32.totalorder %s23, 0
    %p197 = por %p195, %p196
    %p198 = scmp.ne.s32.totalorder %s184, %s185
    %p199 = scmp.eq.s32.totalorder %s24, 3
    %p200 = por %p198, %p199
    %p202 = scmp.ne.s32.totalorder %s185, %s201
    %p203 = scmp.eq.s32.totalorder %s24, 0
    %p204 = por %p202, %p203
    %s205 = ssub.s32 %s26, %s33
    %p206 = scmp.eq.s32.totalorder %s205, 0
    %s208 = sadd.s32 %s207, 1
    %s209 = scalar_select %p206, %s207, %s208
    %p212 = pneg %p206
    %p213 = scmp.eq.s32.totalorder %s18, 3
    %p214 = por %p212, %p213
    %p215 = scmp.ne.s32.totalorder %s207, %s210
    %p216 = scmp.eq.s32.totalorder %s18, 0
    %p217 = por %p215, %p216
    %p218 = scmp.ne.s32.totalorder %s207, %s210
    %p219 = scmp.eq.s32.totalorder %s23, 3
    %p220 = por %p218, %p219
    %p221 = scmp.ne.s32.totalorder %s210, %s211
    %p222 = scmp.eq.s32.totalorder %s23, 0
    %p223 = por %p221, %p222
    %p224 = scmp.ne.s32.totalorder %s210, %s211
    %p225 = scmp.eq.s32.totalorder %s24, 3
    %p226 = por %p224, %p225
    %p228 = scmp.ne.s32.totalorder %s211, %s227
    %p229 = scmp.eq.s32.totalorder %s24, 0
    %p230 = por %p228, %p229
    %s231 = ssub.s32 %s26, %s33
    %p232 = scmp.eq.s32.totalorder %s231, 0
    %s234 = sadd.s32 %s233, 1
    %s235 = scalar_select %p232, %s233, %s234
    %p238 = pneg %p232
    %p239 = scmp.eq.s32.totalorder %s18, 3
    %p240 = por %p238, %p239
    %p241 = scmp.ne.s32.totalorder %s233, %s236
    %p242 = scmp.eq.s32.totalorder %s18, 0
    %p243 = por %p241, %p242
    %p244 = scmp.ne.s32.totalorder %s233, %s236
    %p245 = scmp.eq.s32.totalorder %s23, 3
    %p246 = por %p244, %p245
    %p247 = scmp.ne.s32.totalorder %s236, %s237
    %p248 = scmp.eq.s32.totalorder %s23, 0
    %p249 = por %p247, %p248
    %p250 = scmp.ne.s32.totalorder %s236, %s237
    %p251 = scmp.eq.s32.totalorder %s24, 3
    %p252 = por %p250, %p251
    %p254 = scmp.ne.s32.totalorder %s237, %s253
    %p255 = scmp.eq.s32.totalorder %s24, 0
    %p256 = por %p254, %p255
    %s257 = ssub.s32 %s26, %s33
    %p258 = scmp.eq.s32.totalorder %s257, 0
    %s260 = sadd.s32 %s259, 1
    %s261 = scalar_select %p258, %s259, %s260
    %p264 = pneg %p258
    %p265 = scmp.eq.s32.totalorder %s18, 3
    %p266 = por %p264, %p265
    %p267 = scmp.ne.s32.totalorder %s259, %s262
    %p268 = scmp.eq.s32.totalorder %s18, 0
    %p269 = por %p267, %p268
    %p270 = scmp.ne.s32.totalorder %s259, %s262
    %p271 = scmp.eq.s32.totalorder %s23, 3
    %p272 = por %p270, %p271
    %p273 = scmp.ne.s32.totalorder %s262, %s263
    %p274 = scmp.eq.s32.totalorder %s23, 0
    %p275 = por %p273, %p274
    %p276 = scmp.ne.s32.totalorder %s262, %s263
    %p277 = scmp.eq.s32.totalorder %s24, 3
    %p278 = por %p276, %p277
    %p280 = scmp.ne.s32.totalorder %s263, %s279
    %p281 = scmp.eq.s32.totalorder %s24, 0
    %p282 = por %p280, %p281
    %s283 = ssub.s32 %s26, %s33
    %p284 = scmp.eq.s32.totalorder %s283, 0
    %s286 = sadd.s32 %s285, 1
    %s287 = scalar_select %p284, %s285, %s286
    %p290 = pneg %p284
    %p291 = scmp.eq.s32.totalorder %s18, 3
    %p292 = por %p290, %p291
    %p293 = scmp.ne.s32.totalorder %s285, %s288
    %p294 = scmp.eq.s32.totalorder %s18, 0
    %p295 = por %p293, %p294
    %p296 = scmp.ne.s32.totalorder %s285, %s288
    %p297 = scmp.eq.s32.totalorder %s23, 3
    %p298 = por %p296, %p297
    %p299 = scmp.ne.s32.totalorder %s288, %s289
    %p300 = scmp.eq.s32.totalorder %s23, 0
    %p301 = por %p299, %p300
    %p302 = scmp.ne.s32.totalorder %s288, %s289
    %p303 = scmp.eq.s32.totalorder %s24, 3
    %p304 = por %p302, %p303
    %p306 = scmp.ne.s32.totalorder %s289, %s305
    %p307 = scmp.eq.s32.totalorder %s24, 0
    %p308 = por %p306, %p307
    %s309 = ssub.s32 %s26, %s33
    %p310 = scmp.eq.s32.totalorder %s309, 0
    %s312 = sadd.s32 %s311, 1
    %s313 = scalar_select %p310, %s311, %s312
    %p316 = pneg %p310
    %p317 = scmp.eq.s32.totalorder %s18, 3
    %p318 = por %p316, %p317
    %p319 = scmp.ne.s32.totalorder %s311, %s314
    %p320 = scmp.eq.s32.totalorder %s18, 0
    %p321 = por %p319, %p320
    %p322 = scmp.ne.s32.totalorder %s311, %s314
    %p323 = scmp.eq.s32.totalorder %s23, 3
    %p324 = por %p322, %p323
    %p325 = scmp.ne.s32.totalorder %s314, %s315
    %p326 = scmp.eq.s32.totalorder %s23, 0
    %p327 = por %p325, %p326
    %p328 = scmp.ne.s32.totalorder %s314, %s315
    %p329 = scmp.eq.s32.totalorder %s24, 3
    %p330 = por %p328, %p329
    %p332 = scmp.ne.s32.totalorder %s315, %s331
    %p333 = scmp.eq.s32.totalorder %s24, 0
    %p334 = por %p332, %p333
    %s335 = ssub.s32 %s25, %s37
    %p336 = scmp.eq.s32.totalorder %s335, 0
    %s338 = sadd.s32 %s337, 1
    %s339 = scalar_select %p336, %s337, %s338
    %p342 = pneg %p336
    %p343 = scmp.eq.s32.totalorder %s18, 3
    %p344 = por %p342, %p343
    %p345 = scmp.ne.s32.totalorder %s337, %s340
    %p346 = scmp.eq.s32.totalorder %s18, 0
    %p347 = por %p345, %p346
    %p348 = scmp.ne.s32.totalorder %s337, %s340
    %p349 = scmp.eq.s32.totalorder %s23, 3
    %p350 = por %p348, %p349
    %p351 = scmp.ne.s32.totalorder %s340, %s341
    %p352 = scmp.eq.s32.totalorder %s23, 0
    %p353 = por %p351, %p352
    %p354 = scmp.ne.s32.totalorder %s340, %s341
    %p355 = scmp.eq.s32.totalorder %s24, 3
    %p356 = por %p354, %p355
    %p358 = scmp.ne.s32.totalorder %s341, %s357
    %p359 = scmp.eq.s32.totalorder %s24, 0
    %p360 = por %p358, %p359
    %p361 = scmp.le.s32.totalorder 1, %s18
    %p362 = scmp.lt.s32.totalorder %s18, 5
    %p363 = pnand %p361, %p362
    %p364 = pneg %p363
    // Predicated region
    $region9: #{transformer_forward.2} parent=5 // pred_check
      _
    $region10: #{transformer_forward.2} parent=5 // pred_check_branch
      %366 = sbr.rel (%p363) target = $region12
    $region11: #{transformer_forward.2} parent=5 // pred_region
      %s367 = ssub.s32 %s18, 1
      // Predicated region
      $region13: #{transformer_forward.2} parent=11 // pred_check
        %p368 = pneg %p77
      $region14: #{transformer_forward.2} parent=11 // pred_check_branch
        %370 = sbr.rel (%p368) target = $region16
      $region15: #{transformer_forward.2} parent=11 // pred_region
        _
      $region16: #{transformer_forward.2} parent=11 // pred_fallthru
        _
      // Predicated region
      $region17: #{transformer_forward.2} parent=11 // pred_check
        %p371 = pneg %p98
      $region18: #{transformer_forward.2} parent=11 // pred_check_branch
        %373 = sbr.rel (%p371) target = $region20
      $region19: #{transformer_forward.2} parent=11 // pred_region
        _
      $region20: #{transformer_forward.2} parent=11 // pred_fallthru
        _
      // Predicated region
      $region21: #{transformer_forward.2} parent=11 // pred_check
        %p374 = pneg %p119
      $region22: #{transformer_forward.2} parent=11 // pred_check_branch
        %376 = sbr.rel (%p374) target = $region24
      $region23: #{transformer_forward.2} parent=11 // pred_region
        _
      $region24: #{transformer_forward.2} parent=11 // pred_fallthru
        _
    $region12: #{transformer_forward.2} parent=5 // pred_fallthru
      _
    %p377 = scmp.lt.s32.totalorder %s18, 4
    // Predicated region
    $region25: #{transformer_forward.2} parent=5 // pred_check
      %p378 = pneg %p377
    $region26: #{transformer_forward.2} parent=5 // pred_check_branch
      %380 = sbr.rel (%p378) target = $region28
    $region27: #{transformer_forward.2} parent=5 // pred_region
      // Predicated region
      $region29: #{transformer_forward.2} parent=27 // pred_check
        %p381 = pneg %p50
      $region30: #{transformer_forward.2} parent=27 // pred_check_branch
        %383 = sbr.rel (%p381) target = $region32
      $region31: #{transformer_forward.2} parent=27 // pred_region
        %p384 = scmp.lt.s32.totalorder %s25, 1
        %s385 = scalar_select %p384, %s25, 1
        %s386 = smul.addr %s385, 2
        %s387 = smul.addr %s386, 8
        %s388 = scalar_lea.vmem %s0, %s387
      $region32: #{transformer_forward.2} parent=27 // pred_fallthru
        _
      // Predicated region
      $region33: #{transformer_forward.2} parent=27 // pred_check
        %p389 = pneg %p139
      $region34: #{transformer_forward.2} parent=27 // pred_check_branch
        %391 = sbr.rel (%p389) target = $region36
      $region35: #{transformer_forward.2} parent=27 // pred_region
        %p392 = scmp.lt.s32.totalorder %s26, 1
        %s393 = scalar_select %p392, %s26, 1
        %s394 = scalar_lea.vmem %s4, %s393
      $region36: #{transformer_forward.2} parent=27 // pred_fallthru
        _
      // Predicated region
      $region37: #{transformer_forward.2} parent=27 // pred_check
        %p395 = pneg %p165
      $region38: #{transformer_forward.2} parent=27 // pred_check_branch
        %397 = sbr.rel (%p395) target = $region40
      $region39: #{transformer_forward.2} parent=27 // pred_region
        %p398 = scmp.lt.s32.totalorder %s26, 1
        %s399 = scalar_select %p398, %s26, 1
        %s400 = scalar_lea.vmem %s5, %s399
      $region40: #{transformer_forward.2} parent=27 // pred_fallthru
        _
      // Predicated region
      $region41: #{transformer_forward.2} parent=27 // pred_check
        %p401 = pneg %p191
      $region42: #{transformer_forward.2} parent=27 // pred_check_branch
        %403 = sbr.rel (%p401) target = $region44
      $region43: #{transformer_forward.2} parent=27 // pred_region
        %p404 = scmp.lt.s32.totalorder %s26, 1
        %s405 = scalar_select %p404, %s26, 1
        %s406 = smul.addr %s405, 4
        %s407 = smul.addr %s406, 4
        %s408 = scalar_lea.vmem %s6, %s407
      $region44: #{transformer_forward.2} parent=27 // pred_fallthru
        _
      // Predicated region
      $region45: #{transformer_forward.2} parent=27 // pred_check
        %p409 = pneg %p217
      $region46: #{transformer_forward.2} parent=27 // pred_check_branch
        %411 = sbr.rel (%p409) target = $region48
      $region47: #{transformer_forward.2} parent=27 // pred_region
        %p412 = scmp.lt.s32.totalorder %s26, 1
        %s413 = scalar_select %p412, %s26, 1
        %s414 = smul.addr %s413, 4
        %s415 = smul.addr %s414, 4
        %s416 = scalar_lea.vmem %s7, %s415
      $region48: #{transformer_forward.2} parent=27 // pred_fallthru
        _
      // Predicated region
      $region49: #{transformer_forward.2} parent=27 // pred_check
        %p417 = pneg %p243
      $region50: #{transformer_forward.2} parent=27 // pred_check_branch
        %419 = sbr.rel (%p417) target = $region52
      $region51: #{transformer_forward.2} parent=27 // pred_region
        %p420 = scmp.lt.s32.totalorder %s26, 1
        %s421 = scalar_select %p420, %s26, 1
        %s422 = scalar_lea.vmem %s8, %s421
      $region52: #{transformer_forward.2} parent=27 // pred_fallthru
        _
      // Predicated region
      $region53: #{transformer_forward.2} parent=27 // pred_check
        %p423 = pneg %p269
      $region54: #{transformer_forward.2} parent=27 // pred_check_branch
        %425 = sbr.rel (%p423) target = $region56
      $region55: #{transformer_forward.2} parent=27 // pred_region
        %p426 = scmp.lt.s32.totalorder %s26, 1
        %s427 = scalar_select %p426, %s26, 1
        %s428 = scalar_lea.vmem %s9, %s427
      $region56: #{transformer_forward.2} parent=27 // pred_fallthru
        _
      // Predicated region
      $region57: #{transformer_forward.2} parent=27 // pred_check
        %p429 = pneg %p295
      $region58: #{transformer_forward.2} parent=27 // pred_check_branch
        %431 = sbr.rel (%p429) target = $region60
      $region59: #{transformer_forward.2} parent=27 // pred_region
        %p432 = scmp.lt.s32.totalorder %s26, 1
        %s433 = scalar_select %p432, %s26, 1
        %s434 = smul.addr %s433, 4
        %s435 = smul.addr %s434, 4
        %s436 = scalar_lea.vmem %s10, %s435
      $region60: #{transformer_forward.2} parent=27 // pred_fallthru
        _
      // Predicated region
      $region61: #{transformer_forward.2} parent=27 // pred_check
        %p437 = pneg %p321
      $region62: #{transformer_forward.2} parent=27 // pred_check_branch
        %439 = sbr.rel (%p437) target = $region64
      $region63: #{transformer_forward.2} parent=27 // pred_region
        %p440 = scmp.lt.s32.totalorder %s26, 1
        %s441 = scalar_select %p440, %s26, 1
        %s442 = smul.addr %s441, 8
        %s443 = smul.addr %s442, 4
        %s444 = scalar_lea.vmem %s11, %s443
      $region64: #{transformer_forward.2} parent=27 // pred_fallthru
        _
    $region28: #{transformer_forward.2} parent=5 // pred_fallthru
      _
    %p445 = scmp.le.s32.totalorder 1, %s18
    %p446 = scmp.lt.s32.totalorder %s18, 5
    %p447 = pnand %p445, %p446
    %p448 = pneg %p447
    // Predicated region
    $region65: #{transformer_forward.2} parent=5 // pred_check
      _
    $region66: #{transformer_forward.2} parent=5 // pred_check_branch
      %450 = sbr.rel (%p447) target = $region68
    $region67: #{transformer_forward.2} parent=5 // pred_region
      %s451 = ssub.s32 %s18, 1
      %p452 = scmp.lt.s32.totalorder %s27, 1
      %s453 = scalar_select %p452, %s27, 1
      %s454 = smul.addr %s453, 2
      %s455 = smul.addr %s454, 8
      %s456 = scalar_lea.vmem %s0, %s455
      %p457 = pneg %p56
      %p458 = pneg %p53
      %p459 = pneg %p77
      %p460 = pneg %p74
      %p461 = pneg %p98
      %p462 = pneg %p95
      %p463 = pneg %p119
      %p464 = pneg %p116
      %p465 = scmp.lt.s32.totalorder %s28, 1
      %s466 = scalar_select %p465, %s28, 1
      %s467 = scalar_lea.vmem %s4, %s466
      %p468 = pneg %p145
      %p469 = pneg %p142
      %p470 = scmp.lt.s32.totalorder %s28, 1
      %s471 = scalar_select %p470, %s28, 1
      %s472 = scalar_lea.vmem %s5, %s471
      %p473 = pneg %p171
      %p474 = pneg %p168
      %p475 = scmp.lt.s32.totalorder %s28, 1
      %s476 = scalar_select %p475, %s28, 1
      %s477 = smul.addr %s476, 4
      %s478 = smul.addr %s477, 4
      %s479 = scalar_lea.vmem %s6, %s478
      %p480 = pneg %p197
      %p481 = pneg %p194
      %p482 = scmp.lt.s32.totalorder %s28, 1
      %s483 = scalar_select %p482, %s28, 1
      %s484 = smul.addr %s483, 4
      %s485 = smul.addr %s484, 4
      %s486 = scalar_lea.vmem %s7, %s485
      %p487 = pneg %p223
      %p488 = pneg %p220
      %p489 = scmp.lt.s32.totalorder %s28, 1
      %s490 = scalar_select %p489, %s28, 1
      %s491 = scalar_lea.vmem %s8, %s490
      %p492 = pneg %p249
      %p493 = pneg %p246
      %p494 = scmp.lt.s32.totalorder %s28, 1
      %s495 = scalar_select %p494, %s28, 1
      %s496 = scalar_lea.vmem %s9, %s495
      %p497 = pneg %p275
      %p498 = pneg %p272
      %p499 = scmp.lt.s32.totalorder %s28, 1
      %s500 = scalar_select %p499, %s28, 1
      %s501 = smul.addr %s500, 4
      %s502 = smul.addr %s501, 4
      %s503 = scalar_lea.vmem %s10, %s502
      %p504 = pneg %p301
      %p505 = pneg %p298
      %p506 = scmp.lt.s32.totalorder %s28, 1
      %s507 = scalar_select %p506, %s28, 1
      %s508 = smul.addr %s507, 8
      %s509 = smul.addr %s508, 4
      %s510 = scalar_lea.vmem %s11, %s509
      %p511 = pneg %p327
      %p512 = pneg %p324
      %p513 = pneg %p353
      %p514 = pneg %p350
      %p515 = scmp.lt.s32.totalorder %s27, 1
      %s516 = scalar_select %p515, %s27, 1
      %s517 = smul.addr %s516, 2
      %s518 = smul.addr %s517, 8
      %s519 = scalar_lea.vmem %s12, %s518
      %p520 = scmp.lt.s32.totalorder %s27, 1
      %s521 = scalar_select %p520, %s27, 1
      %s522 = smul.addr %s521, 2
      %s523 = smul.addr %s522, 8
      %s524 = scalar_lea.vmem %s0, %s523
      %p525 = scmp.lt.s32.totalorder %s28, 1
      %s526 = scalar_select %p525, %s28, 1
      %s527 = scalar_lea.vmem %s4, %s526
      %p528 = scmp.lt.s32.totalorder %s28, 1
      %s529 = scalar_select %p528, %s28, 1
      %s530 = scalar_lea.vmem %s5, %s529
      %p531 = scmp.lt.s32.totalorder %s28, 1
      %s532 = scalar_select %p531, %s28, 1
      %s533 = smul.addr %s532, 4
      %s534 = smul.addr %s533, 4
      %s535 = scalar_lea.vmem %s6, %s534
      %p536 = scmp.lt.s32.totalorder %s28, 1
      %s537 = scalar_select %p536, %s28, 1
      %s538 = smul.addr %s537, 4
      %s539 = smul.addr %s538, 4
      %s540 = scalar_lea.vmem %s7, %s539
      %p541 = scmp.lt.s32.totalorder %s28, 1
      %s542 = scalar_select %p541, %s28, 1
      %s543 = scalar_lea.vmem %s8, %s542
      %p544 = scmp.lt.s32.totalorder %s28, 1
      %s545 = scalar_select %p544, %s28, 1
      %s546 = scalar_lea.vmem %s9, %s545
      %p547 = scmp.lt.s32.totalorder %s28, 1
      %s548 = scalar_select %p547, %s28, 1
      %s549 = smul.addr %s548, 4
      %s550 = smul.addr %s549, 4
      %s551 = scalar_lea.vmem %s10, %s550
      %p552 = scmp.lt.s32.totalorder %s28, 1
      %s553 = scalar_select %p552, %s28, 1
      %s554 = smul.addr %s553, 8
      %s555 = smul.addr %s554, 4
      %s556 = scalar_lea.vmem %s11, %s555
      %p557 = scmp.lt.s32.totalorder %s27, 1
      %s558 = scalar_select %p557, %s27, 1
      %s559 = smul.addr %s558, 2
      %s560 = smul.addr %s559, 8
      %s561 = scalar_lea.vmem %s12, %s560
      %p563 = scmp.eq.s32.totalorder %s28, 0
      // Predicated region
      $region69: #{transformer_forward.2} parent=67 // pred_check
        %p564 = pneg %p563
      $region70: #{transformer_forward.2} parent=67 // pred_check_branch
        %566 = sbr.rel (%p564) target = $region72
      $region71: #{transformer_forward.2} parent=67 // pred_region
        %v567 = vld [vmem:[%s524] sm:$0xff]
        %v568 = vld [vmem:[%s524 + $0x8] sm:$0x1]
        %vm569 = vcmask 261120
        %570 = vst.msk [vmem:[%s561] sm:$0xff] %vm569, %v567
        %vm571 = vcmask 253952
        %572 = vst.msk [vmem:[%s561 + $0x8] sm:$0x1] %vm571, %v568
      $region72: #{transformer_forward.2} parent=67 // pred_fallthru
        _
      %v573 = vld [vmem:[%s561] sm:$0xff]
      %v574 = vld [vmem:[%s561 + $0x8] sm:$0x1]
      %v575 = vld [vmem:[%s1] sm:$0xff]
      %v576 = vld [vmem:[%s1 + $0x8] sm:$0x1]
      %v577 = vld [vmem:[%s2] sm:$0xff]
      %v578 = vld [vmem:[%s2 + $0x8] sm:$0x1]
      %v579 = vld [vmem:[%s3] sm:$0xff]
      %v580 = vld [vmem:[%s3 + $0x8] sm:$0x1]
      %v581 = vld [vmem:[%s527] sm:$0x1]
      %v582 = vld [vmem:[%s530] sm:$0x1]
      %v583 = vld [vmem:[%s535] sm:$0xf]
      %v584 = vld [vmem:[%s535 + $0x4] sm:$0xf]
      %v585 = vld [vmem:[%s535 + $0x8] sm:$0xf]
      %v586 = vld [vmem:[%s535 + $0xc] sm:$0xf]
      %v587 = vld [vmem:[%s540] sm:$0xf]
      %v588 = vld [vmem:[%s540 + $0x4] sm:$0xf]
      %v589 = vld [vmem:[%s540 + $0x8] sm:$0xf]
      %v590 = vld [vmem:[%s540 + $0xc] sm:$0xf]
      %v591 = vld [vmem:[%s543] sm:$0x1]
      %v592 = vld [vmem:[%s546] sm:$0x1]
      %v593 = vld [vmem:[%s551] sm:$0xf]
      %v594 = vld [vmem:[%s551 + $0x4] sm:$0xf]
      %v595 = vld [vmem:[%s551 + $0x8] sm:$0xf]
      %v596 = vld [vmem:[%s551 + $0xc] sm:$0xf]
      %v597 = vld [vmem:[%s556] sm:$0xf]
      %v598 = vld [vmem:[%s556 + $0x4] sm:$0xf]
      %v599 = vld [vmem:[%s556 + $0x8] sm:$0xf]
      %v600 = vld [vmem:[%s556 + $0xc] sm:$0xf]
      %v601 = vld [vmem:[%s556 + $0x10] sm:$0xf]
      %v602 = vld [vmem:[%s556 + $0x14] sm:$0xf]
      %v603 = vld [vmem:[%s556 + $0x18] sm:$0xf]
      %v604 = vld [vmem:[%s556 + $0x1c] sm:$0xf]
      %vm605 = vcmask 261120
      %v606 = vsel %vm605, %v573, 0.0
      %607 = vadd.xlane.f32.xlu0 %v606
      %v608 = vpop.xlane.xlu0 %607
      %vm609 = vcmask 253952
      %v610 = vsel %vm609, %v574, 0.0
      %611 = vadd.xlane.f32.xlu0 %v610
      %v612 = vpop.xlane.xlu0 %611
      %v613 = vrcp.pop 32.0
      %v614 = vmul.f32 32.0, %v613
      %v615 = vsub.f32 1.0, %v614
      %v616 = vmul.f32 %v613, %v615
      %v617 = vadd.f32 %v613, %v616
      %vm618 = vweird.f32 %v613
      %v619 = vsel %vm618, %v613, %v617
      %v620 = vmul.f32 %v608, %v619
      %v621 = vmul.f32 %v612, %v619
      %v622 = vsub.f32 %v573, %v620
      %v623 = vsub.f32 %v574, %v621
      %v624 = vmul.f32 %v622, %v622
      %v625 = vmul.f32 %v623, %v623
      %v626 = vsel %vm605, %v624, 0.0
      %627 = vadd.xlane.f32.xlu0 %v626
      %v628 = vpop.xlane.xlu0 %627
      %v629 = vsel %vm609, %v625, 0.0
      %630 = vadd.xlane.f32.xlu0 %v629
      %v631 = vpop.xlane.xlu0 %630
      %v632 = vmul.f32 %v628, %v619
      %v633 = vmul.f32 %v631, %v619
      %v634 = vadd.f32 %v632, 1e-05
      %v635 = vadd.f32 %v633, 1e-05
      %v636 = vrsqrt.pop %v634
      %v637 = vmul.f32 %v636, %v634
      %v638 = vmul.f32 %v637, %v636
      %v639 = vmul.f32 0.5, %v638
      %v640 = vsub.f32 1.5, %v639
      %v641 = vmul.f32 %v636, %v640
      %vm642 = vweird.f32 %v634
      %vm643 = vweird.f32 %v636
      %vm644 = vmor %vm642, %vm643
      %v645 = vsel %vm644, %v636, %v641
      %v646 = vrsqrt.pop %v635
      %v647 = vmul.f32 %v646, %v635
      %v648 = vmul.f32 %v647, %v646
      %v649 = vmul.f32 0.5, %v648
      %v650 = vsub.f32 1.5, %v649
      %v651 = vmul.f32 %v646, %v650
      %vm652 = vweird.f32 %v635
      %vm653 = vweird.f32 %v646
      %vm654 = vmor %vm652, %vm653
      %v655 = vsel %vm654, %v646, %v651
      %v656 = vmul.f32 %v622, %v645
      %v657 = vmul.f32 %v623, %v655
      %v659 = vperm.slane %v581, 0
      %v661 = vmul.f32 %v656, %v659
      %v662 = vmul.f32 %v657, %v659
      %v664 = vperm.slane %v582, 0
      %v666 = vadd.f32 %v661, %v664
      %v667 = vadd.f32 %v662, %v664
      %v668 = vpack.c.bf16 %v667, %v666
      %v673 = vunpack.c.l.b16 %v583
      %v674 = vunpack.c.l.b16 %v584
      %v675 = vunpack.c.l.b16 %v585
      %v676 = vunpack.c.l.b16 %v586
      %v677 = vpack.c.b16 %v674, %v673
      %v678 = vpack.c.b16 %v676, %v675
      %v682 = vsel %vm605, %v668, 0
      %684 = vmatpush.bf16.msra.mxu0 0
      %685 = vmatpush.bf16.msra.mxu0 0
      %686 = vmatpush.bf16.msra.mxu0 0
      %687 = vmatpush.bf16.msra.mxu0 0
      %688 = vmatpush.bf16.msra.mxu0 0
      %689 = vmatpush.bf16.msra.mxu0 0
      %690 = vmatpush.bf16.msra.mxu0 %v678
      %691 = vmatpush.bf16.msra.mxu0 %v677
      %692 = vmatmul.bf16.gmra.mxu0 %v682
      %v693 = vpop.f32.mrf.mxu0
      %v694 = vadd.f32 0.0, %v693
      %v695 = vpop.f32.mrf.mxu0
      %v696 = vadd.f32 0.0, %v695
      %697 = vdwg.mxu0
      %700 = vrot.lane.b32.xlu0 %v694, 124
      %v701 = vpop.permute.xlu0 %700
      %702 = vrot.lane.b32.xlu0 %v696, 124
      %v703 = vpop.permute.xlu0 %702
      %706 = vrot.lane.b32.xlu0 %v694, 28
      %v707 = vpop.permute.xlu0 %706
      %708 = vrot.lane.b32.xlu0 %v696, 28
      %v709 = vpop.permute.xlu0 %708
      %vm712 = vcmask 228352
      %v713 = vsel %vm712, %v701, %v707
      %v714 = vsel %vm712, %v703, %v709
      %715 = vrot.lane.b32.xlu0 %v694, 100
      %v716 = vpop.permute.xlu0 %715
      %717 = vrot.lane.b32.xlu0 %v696, 100
      %v718 = vpop.permute.xlu0 %717
      %721 = vrot.lane.b32.xlu0 %v694, 4
      %v722 = vpop.permute.xlu0 %721
      %723 = vrot.lane.b32.xlu0 %v696, 4
      %v724 = vpop.permute.xlu0 %723
      %vm727 = vcmask 31744
      %v728 = vsel %vm727, %v716, %v722
      %v729 = vsel %vm727, %v718, %v724
      %v730 = vmul.f32 %v694, %v575
      %v731 = vmul.f32 %v696, %v576
      %v732 = vmul.f32 %v713, %v577
      %v733 = vmul.f32 %v714, %v578
      %v734 = vadd.f32 %v730, %v732
      %v735 = vadd.f32 %v731, %v733
      %v736 = vmul.f32 %v728, %v579
      %v737 = vmul.f32 %v729, %v580
      %v738 = vadd.f32 %v734, %v736
      %v739 = vadd.f32 %v735, %v737
      %740 = vrot.lane.b32.xlu0 %v694, 92
      %v741 = vpop.permute.xlu0 %740
      %742 = vrot.lane.b32.xlu0 %v696, 92
      %v743 = vpop.permute.xlu0 %742
      %v746 = vsel %vm712, %v741, %v701
      %v747 = vsel %vm712, %v743, %v703
      %748 = vrot.lane.b32.xlu0 %v694, 68
      %v749 = vpop.permute.xlu0 %748
      %750 = vrot.lane.b32.xlu0 %v696, 68
      %v751 = vpop.permute.xlu0 %750
      %v754 = vsel %vm727, %v749, %v716
      %v755 = vsel %vm727, %v751, %v718
      %758 = vrot.lane.b32.xlu0 %v575, 32
      %v759 = vpop.permute.xlu0 %758
      %760 = vrot.lane.b32.xlu0 %v576, 32
      %v761 = vpop.permute.xlu0 %760
      %v764 = vmul.f32 %v694, %v759
      %v765 = vmul.f32 %v696, %v761
      %v766 = vmul.f32 %v746, %v577
      %v767 = vmul.f32 %v747, %v578
      %770 = vrot.lane.b32.xlu0 %v766, 32
      %v771 = vpop.permute.xlu0 %770
      %772 = vrot.lane.b32.xlu0 %v767, 32
      %v773 = vpop.permute.xlu0 %772
      %v776 = vadd.f32 %v764, %v771
      %v777 = vadd.f32 %v765, %v773
      %v778 = vmul.f32 %v754, %v579
      %v779 = vmul.f32 %v755, %v580
      %782 = vrot.lane.b32.xlu0 %v778, 32
      %v783 = vpop.permute.xlu0 %782
      %784 = vrot.lane.b32.xlu0 %v779, 32
      %v785 = vpop.permute.xlu0 %784
      %v788 = vadd.f32 %v776, %v783
      %v789 = vadd.f32 %v777, %v785
      %792 = vrot.lane.b32.xlu0 %v738, 112
      %v793 = vpop.permute.xlu0 %792
      %794 = vrot.lane.b32.xlu0 %v739, 112
      %v795 = vpop.permute.xlu0 %794
      %v798 = vmul.f32 %v738, 0.25
      %v799 = vmul.f32 %v739, 0.25
      %v800 = vmul.f32 %v793, 0.25
      %v801 = vmul.f32 %v795, 0.25
      %v802 = vpack.c.bf16 %v798, %v798
      %v803 = vpack.c.bf16 %v799, %v799
      %v804 = vpack.c.bf16 %v800, %v800
      %v805 = vpack.c.bf16 %v801, %v801
      %808 = vrot.lane.b32.xlu0 %v788, 112
      %v809 = vpop.permute.xlu0 %808
      %810 = vrot.lane.b32.xlu0 %v789, 112
      %v811 = vpop.permute.xlu0 %810
      %v814 = vpack.c.bf16 %v788, %v788
      %v815 = vpack.c.bf16 %v789, %v789
      %v816 = vpack.c.bf16 %v809, %v809
      %v817 = vpack.c.bf16 %v811, %v811
      %818 = vrot.lane.b32.xlu0 %v694, 112
      %v819 = vpop.permute.xlu0 %818
      %820 = vrot.lane.b32.xlu0 %v696, 112
      %v821 = vpop.permute.xlu0 %820
      %v824 = vpack.c.bf16 %v694, %v694
      %v825 = vpack.c.bf16 %v696, %v696
      %v826 = vpack.c.bf16 %v819, %v819
      %v827 = vpack.c.bf16 %v821, %v821
      %v830 = vunpack.c.l.b16 %v802
      %v831 = vunpack.c.l.b16 %v803
      %v832 = vpack.c.b16 %v831, %v830
      %v835 = vunpack.c.l.b16 %v814
      %v836 = vunpack.c.l.b16 %v815
      %v837 = vpack.c.b16 %v836, %v835
      %838 = vrot.lane.b32.xlu0 %v837, 96
      %v839 = vpop.permute.xlu0 %838
      %vm840 = vcmask 130048
      %v842 = vsel %vm840, %v832, 0
      %v845 = vsel %vm840, %v839, 0
      %847 = vmatpush.bf16.xpose.msra.mxu0 0
      %848 = vmatpush.bf16.xpose.msra.mxu0 0
      %849 = vmatpush.bf16.xpose.msra.mxu0 0
      %850 = vmatpush.bf16.xpose.msra.mxu0 0
      %851 = vmatpush.bf16.xpose.msra.mxu0 0
      %852 = vmatpush.bf16.xpose.msra.mxu0 0
      %853 = vmatpush.bf16.xpose.msra.mxu0 0
      %854 = vmatpush.bf16.xpose.msra.mxu0 %v845
      %855 = vmatmul.bf16.gmra.mxu0 %v842
      %v856 = vpop.f32.mrf.mxu0
      %v857 = vadd.f32 0.0, %v856
      %v858 = vpop.f32.mrf.mxu0
      %v859 = vadd.f32 0.0, %v858
      %860 = vdwg.mxu0
      %v863 = vunpack.c.l.b16 %v804
      %v864 = vunpack.c.l.b16 %v805
      %v865 = vpack.c.b16 %v864, %v863
      %v868 = vunpack.c.l.b16 %v816
      %v869 = vunpack.c.l.b16 %v817
      %v870 = vpack.c.b16 %v869, %v868
      %871 = vrot.lane.b32.xlu0 %v870, 96
      %v872 = vpop.permute.xlu0 %871
      %v874 = vsel %vm840, %v865, 0
      %v877 = vsel %vm840, %v872, 0
      %879 = vmatpush.bf16.xpose.msra.mxu0 0
      %880 = vmatpush.bf16.xpose.msra.mxu0 0
      %881 = vmatpush.bf16.xpose.msra.mxu0 0
      %882 = vmatpush.bf16.xpose.msra.mxu0 0
      %883 = vmatpush.bf16.xpose.msra.mxu0 0
      %884 = vmatpush.bf16.xpose.msra.mxu0 0
      %885 = vmatpush.bf16.xpose.msra.mxu0 0
      %886 = vmatpush.bf16.xpose.msra.mxu0 %v877
      %887 = vmatmul.bf16.gmra.mxu0 %v874
      %v888 = vpop.f32.mrf.mxu0
      %v889 = vadd.f32 0.0, %v888
      %v890 = vpop.f32.mrf.mxu0
      %v891 = vadd.f32 0.0, %v890
      %892 = vdwg.mxu0
      %v893 = vlaneseq
      %v894 = vshrl.u32 %v893, 7
      %v895 = vadd.s32 %v894, 8
      %v896 = vlaneseq
      %v897 = vand.u32 %v896, 127
      %vm898 = vcmp.ge.s32.totalorder %v894, %v897
      %vm899 = vcmp.ge.s32.totalorder %v895, %v897
      %v900 = vsel %vm898, 1, 0
      %v901 = vsel %vm899, 1, 0
      %vm902 = vcmp.eq.s32.totalorder %v900, 1
      %vm903 = vcmp.eq.s32.totalorder %v901, 1
      %v904 = vsel %vm902, %v857, -1e+30
      %v905 = vsel %vm903, %v859, -1e+30
      %v906 = vsel %vm902, %v889, -1e+30
      %v907 = vsel %vm903, %v891, -1e+30
      %vm908 = vcmask 72704
      %v909 = vsel %vm908, %v904, -inf
      %910 = vmax.xlane.f32.xlu0 %v909
      %v911 = vpop.xlane.xlu0 %910
      %vm912 = vcmask 65536
      %v913 = vsel %vm912, %v905, -inf
      %914 = vmax.xlane.f32.xlu0 %v913
      %v915 = vpop.xlane.xlu0 %914
      %v916 = vsel %vm908, %v906, -inf
      %917 = vmax.xlane.f32.xlu0 %v916
      %v918 = vpop.xlane.xlu0 %917
      %v919 = vsel %vm912, %v907, -inf
      %920 = vmax.xlane.f32.xlu0 %v919
      %v921 = vpop.xlane.xlu0 %920
      %v922 = vsub.f32 %v904, %v911
      %v923 = vsub.f32 %v905, %v915
      %v924 = vsub.f32 %v906, %v918
      %v925 = vsub.f32 %v907, %v921
      %v926 = vmul.f32 %v922, 1.442695
      %v927 = vpow.pop %v926
      %v928 = vmul.f32 %v923, 1.442695
      %v929 = vpow.pop %v928
      %v930 = vmul.f32 %v924, 1.442695
      %v931 = vpow.pop %v930
      %v932 = vmul.f32 %v925, 1.442695
      %v933 = vpow.pop %v932
      %v934 = vsel %vm908, %v927, 0.0
      %935 = vadd.xlane.f32.xlu0 %v934
      %v936 = vpop.xlane.xlu0 %935
      %v937 = vsel %vm912, %v929, 0.0
      %938 = vadd.xlane.f32.xlu0 %v937
      %v939 = vpop.xlane.xlu0 %938
      %v940 = vsel %vm908, %v931, 0.0
      %941 = vadd.xlane.f32.xlu0 %v940
      %v942 = vpop.xlane.xlu0 %941
      %v943 = vsel %vm912, %v933, 0.0
      %944 = vadd.xlane.f32.xlu0 %v943
      %v945 = vpop.xlane.xlu0 %944
      %v946 = vpack.c.bf16 %v927, %v927
      %v947 = vpack.c.bf16 %v929, %v929
      %v948 = vpack.c.bf16 %v931, %v931
      %v949 = vpack.c.bf16 %v933, %v933
      %v952 = vunpack.c.l.b16 %v946
      %v953 = vunpack.c.l.b16 %v947
      %v954 = vpack.c.b16 %v953, %v952
      %v957 = vunpack.c.l.b16 %v824
      %v958 = vunpack.c.l.b16 %v825
      %v959 = vpack.c.b16 %v958, %v957
      %960 = vrot.lane.b32.xlu0 %v959, 64
      %v961 = vpop.permute.xlu0 %960
      %v963 = vsel %vm908, %v954, 0
      %vm965 = vcmask 1043456
      %vm966 = vcmask 1044480
      %v967 = vsel %vm965, 4294967295, 65535
      %v968 = vsel %vm966, %v967, 0
      %v970 = vand.u32 %v961, %v968
      %972 = vmatpush.bf16.msra.mxu0 0
      %973 = vmatpush.bf16.msra.mxu0 0
      %974 = vmatpush.bf16.msra.mxu0 0
      %975 = vmatpush.bf16.msra.mxu0 0
      %976 = vmatpush.bf16.msra.mxu0 0
      %977 = vmatpush.bf16.msra.mxu0 0
      %978 = vmatpush.bf16.msra.mxu0 0
      %979 = vmatpush.bf16.msra.mxu0 %v970
      %980 = vmatmul.bf16.gmra.mxu0 %v963
      %v981 = vpop.f32.mrf.mxu0
      %v982 = vadd.f32 0.0, %v981
      %v983 = vpop.f32.mrf.mxu0
      %v984 = vadd.f32 0.0, %v983
      %985 = vdwg.mxu0
      %v988 = vunpack.c.l.b16 %v948
      %v989 = vunpack.c.l.b16 %v949
      %v990 = vpack.c.b16 %v989, %v988
      %v993 = vunpack.c.l.b16 %v826
      %v994 = vunpack.c.l.b16 %v827
      %v995 = vpack.c.b16 %v994, %v993
      %996 = vrot.lane.b32.xlu0 %v995, 64
      %v997 = vpop.permute.xlu0 %996
      %v999 = vsel %vm908, %v990, 0
      %v1002 = vand.u32 %v997, %v968
      %1004 = vmatpush.bf16.msra.mxu0 0
      %1005 = vmatpush.bf16.msra.mxu0 0
      %1006 = vmatpush.bf16.msra.mxu0 0
      %1007 = vmatpush.bf16.msra.mxu0 0
      %1008 = vmatpush.bf16.msra.mxu0 0
      %1009 = vmatpush.bf16.msra.mxu0 0
      %1010 = vmatpush.bf16.msra.mxu0 0
      %1011 = vmatpush.bf16.msra.mxu0 %v1002
      %1012 = vmatmul.bf16.gmra.mxu0 %v999
      %v1013 = vpop.f32.mrf.mxu0
      %v1014 = vadd.f32 0.0, %v1013
      %v1015 = vpop.f32.mrf.mxu0
      %v1016 = vadd.f32 0.0, %v1015
      %1017 = vdwg.mxu0
      %v1018 = vrcp.pop %v936
      %v1019 = vrcp.pop %v939
      %v1020 = vrcp.pop %v942
      %v1021 = vrcp.pop %v945
      %v1022 = vmul.f32 %v982, %v1018
      %v1023 = vmul.f32 %v984, %v1019
      %v1024 = vmul.f32 %v1014, %v1020
      %v1025 = vmul.f32 %v1016, %v1021
      %1028 = vrot.lane.b32.xlu0 %v1024, 16
      %v1029 = vpop.permute.xlu0 %1028
      %1030 = vrot.lane.b32.xlu0 %v1025, 16
      %v1031 = vpop.permute.xlu0 %1030
      %v1034 = vsel %vm840, %v1022, %v1029
      %v1035 = vsel %vm840, %v1023, %v1031
      %v1036 = vpack.c.bf16 %v1035, %v1034
      %v1041 = vunpack.c.l.b16 %v587
      %v1042 = vunpack.c.l.b16 %v588
      %v1043 = vunpack.c.l.b16 %v589
      %v1044 = vunpack.c.l.b16 %v590
      %v1045 = vpack.c.b16 %v1042, %v1041
      %v1046 = vpack.c.b16 %v1044, %v1043
      %v1050 = vsel %vm605, %v1036, 0
      %1052 = vmatpush.bf16.msra.mxu0 0
      %1053 = vmatpush.bf16.msra.mxu0 0
      %1054 = vmatpush.bf16.msra.mxu0 0
      %1055 = vmatpush.bf16.msra.mxu0 0
      %1056 = vmatpush.bf16.msra.mxu0 0
      %1057 = vmatpush.bf16.msra.mxu0 0
      %1058 = vmatpush.bf16.msra.mxu0 %v1046
      %1059 = vmatpush.bf16.msra.mxu0 %v1045
      %1060 = vmatmul.bf16.gmra.mxu0 %v1050
      %v1061 = vpop.f32.mrf.mxu0
      %v1062 = vadd.f32 0.0, %v1061
      %v1063 = vpop.f32.mrf.mxu0
      %v1064 = vadd.f32 0.0, %v1063
      %1065 = vdwg.mxu0
      %v1066 = vadd.f32 %v573, %v1062
      %v1067 = vadd.f32 %v574, %v1064
      %v1068 = vsel %vm605, %v1066, 0.0
      %1069 = vadd.xlane.f32.xlu0 %v1068
      %v1070 = vpop.xlane.xlu0 %1069
      %v1071 = vsel %vm609, %v1067, 0.0
      %1072 = vadd.xlane.f32.xlu0 %v1071
      %v1073 = vpop.xlane.xlu0 %1072
      %v1074 = vmul.f32 %v1070, %v619
      %v1075 = vmul.f32 %v1073, %v619
      %v1076 = vsub.f32 %v1066, %v1074
      %v1077 = vsub.f32 %v1067, %v1075
      %v1078 = vmul.f32 %v1076, %v1076
      %v1079 = vmul.f32 %v1077, %v1077
      %v1080 = vsel %vm605, %v1078, 0.0
      %1081 = vadd.xlane.f32.xlu0 %v1080
      %v1082 = vpop.xlane.xlu0 %1081
      %v1083 = vsel %vm609, %v1079, 0.0
      %1084 = vadd.xlane.f32.xlu0 %v1083
      %v1085 = vpop.xlane.xlu0 %1084
      %v1086 = vmul.f32 %v1082, %v619
      %v1087 = vmul.f32 %v1085, %v619
      %v1088 = vadd.f32 %v1086, 1e-05
      %v1089 = vadd.f32 %v1087, 1e-05
      %v1090 = vrsqrt.pop %v1088
      %v1091 = vmul.f32 %v1090, %v1088
      %v1092 = vmul.f32 %v1091, %v1090
      %v1093 = vmul.f32 0.5, %v1092
      %v1094 = vsub.f32 1.5, %v1093
      %v1095 = vmul.f32 %v1090, %v1094
      %vm1096 = vweird.f32 %v1088
      %vm1097 = vweird.f32 %v1090
      %vm1098 = vmor %vm1096, %vm1097
      %v1099 = vsel %vm1098, %v1090, %v1095
      %v1100 = vrsqrt.pop %v1089
      %v1101 = vmul.f32 %v1100, %v1089
      %v1102 = vmul.f32 %v1101, %v1100
      %v1103 = vmul.f32 0.5, %v1102
      %v1104 = vsub.f32 1.5, %v1103
      %v1105 = vmul.f32 %v1100, %v1104
      %vm1106 = vweird.f32 %v1089
      %vm1107 = vweird.f32 %v1100
      %vm1108 = vmor %vm1106, %vm1107
      %v1109 = vsel %vm1108, %v1100, %v1105
      %v1110 = vmul.f32 %v1076, %v1099
      %v1111 = vmul.f32 %v1077, %v1109
      %v1113 = vperm.slane %v591, 0
      %v1115 = vmul.f32 %v1110, %v1113
      %v1116 = vmul.f32 %v1111, %v1113
      %v1118 = vperm.slane %v592, 0
      %v1120 = vadd.f32 %v1115, %v1118
      %v1121 = vadd.f32 %v1116, %v1118
      %v1122 = vpack.c.bf16 %v1121, %v1120
      %v1127 = vunpack.c.l.b16 %v593
      %v1128 = vunpack.c.l.b16 %v594
      %v1129 = vunpack.c.l.b16 %v595
      %v1130 = vunpack.c.l.b16 %v596
      %v1131 = vpack.c.b16 %v1128, %v1127
      %v1132 = vpack.c.b16 %v1130, %v1129
      %v1136 = vsel %vm605, %v1122, 0
      %1138 = vmatpush.bf16.msra.mxu0 0
      %1139 = vmatpush.bf16.msra.mxu0 0
      %1140 = vmatpush.bf16.msra.mxu0 0
      %1141 = vmatpush.bf16.msra.mxu0 0
      %1142 = vmatpush.bf16.msra.mxu0 0
      %1143 = vmatpush.bf16.msra.mxu0 0
      %1144 = vmatpush.bf16.msra.mxu0 %v1132
      %1145 = vmatpush.bf16.msra.mxu0 %v1131
      %1146 = vmatmul.bf16.gmra.mxu0 %v1136
      %v1147 = vpop.f32.mrf.mxu0
      %v1148 = vadd.f32 0.0, %v1147
      %v1149 = vpop.f32.mrf.mxu0
      %v1150 = vadd.f32 0.0, %v1149
      %1151 = vdwg.mxu0
      %v1152 = vxor.u32 %v1148, 2147483648
      %v1153 = vxor.u32 %v1150, 2147483648
      %v1154 = vmul.f32 %v1152, 1.442695
      %v1155 = vpow.pop %v1154
      %v1156 = vmul.f32 %v1153, 1.442695
      %v1157 = vpow.pop %v1156
      %v1158 = vadd.f32 %v1155, 1.0
      %v1159 = vadd.f32 %v1157, 1.0
      %v1160 = vrcp.pop %v1158
      %v1161 = vmul.f32 %v1158, %v1160
      %v1162 = vsub.f32 1.0, %v1161
      %v1163 = vmul.f32 %v1160, %v1162
      %v1164 = vadd.f32 %v1160, %v1163
      %vm1165 = vweird.f32 %v1158
      %vm1166 = vweird.f32 %v1160
      %vm1167 = vmor %vm1165, %vm1166
      %v1168 = vsel %vm1167, %v1160, %v1164
      %v1169 = vand.u32 2147483647, %v1158
      %vm1170 = vcmp.eq.f32.partialorder %v1169, 8.507059e+37
      %v1171 = vand.u32 %v1158, 2147483648
      %v1172 = vor.u32 1.1754944e-38, %v1171
      %v1173 = vsel %vm1170, %v1172, %v1168
      %v1174 = vmul.f32 1.0, %v1173
      %v1175 = vrcp.pop %v1159
      %v1176 = vmul.f32 %v1159, %v1175
      %v1177 = vsub.f32 1.0, %v1176
      %v1178 = vmul.f32 %v1175, %v1177
      %v1179 = vadd.f32 %v1175, %v1178
      %vm1180 = vweird.f32 %v1159
      %vm1181 = vweird.f32 %v1175
      %vm1182 = vmor %vm1180, %vm1181
      %v1183 = vsel %vm1182, %v1175, %v1179
      %v1184 = vand.u32 2147483647, %v1159
      %vm1185 = vcmp.eq.f32.partialorder %v1184, 8.507059e+37
      %v1186 = vand.u32 %v1159, 2147483648
      %v1187 = vor.u32 1.1754944e-38, %v1186
      %v1188 = vsel %vm1185, %v1187, %v1183
      %v1189 = vmul.f32 1.0, %v1188
      %v1190 = vmul.f32 %v1148, %v1174
      %v1191 = vmul.f32 %v1150, %v1189
      %1194 = vrot.lane.b32.xlu0 %v1190, 64
      %v1195 = vpop.permute.xlu0 %1194
      %1196 = vrot.lane.b32.xlu0 %v1191, 64
      %v1197 = vpop.permute.xlu0 %1196
      %v1200 = vmul.f32 %v1148, %v1195
      %v1201 = vmul.f32 %v1150, %v1197
      %v1202 = vpack.c.bf16 %v1201, %v1200
      %v1211 = vunpack.c.l.b16 %v597
      %v1212 = vunpack.c.l.b16 %v598
      %v1213 = vunpack.c.l.b16 %v599
      %v1214 = vunpack.c.l.b16 %v600
      %v1215 = vunpack.c.l.b16 %v601
      %v1216 = vunpack.c.l.b16 %v602
      %v1217 = vunpack.c.l.b16 %v603
      %v1218 = vunpack.c.l.b16 %v604
      %v1219 = vpack.c.b16 %v1212, %v1211
      %v1220 = vpack.c.b16 %v1214, %v1213
      %v1221 = vpack.c.b16 %v1216, %v1215
      %v1222 = vpack.c.b16 %v1218, %v1217
      %vm1227 = vcmask 523264
      %v1229 = vsel %vm1227, %v1202, 0
      %1231 = vmatpush.bf16.msra.mxu0 0
      %1232 = vmatpush.bf16.msra.mxu0 0
      %1233 = vmatpush.bf16.msra.mxu0 0
      %1234 = vmatpush.bf16.msra.mxu0 0
      %1235 = vmatpush.bf16.msra.mxu0 %v1222
      %1236 = vmatpush.bf16.msra.mxu0 %v1221
      %1237 = vmatpush.bf16.msra.mxu0 %v1220
      %1238 = vmatpush.bf16.msra.mxu0 %v1219
      %1239 = vmatmul.bf16.gmra.mxu0 %v1229
      %v1240 = vpop.f32.mrf.mxu0
      %v1241 = vadd.f32 0.0, %v1240
      %v1242 = vpop.f32.mrf.mxu0
      %v1243 = vadd.f32 0.0, %v1242
      %1244 = vdwg.mxu0
      %v1245 = vadd.f32 %v1066, %v1241
      %v1246 = vadd.f32 %v1067, %v1243
      %1247 = vst.msk [vmem:[%s561] sm:$0xff] %vm605, %v1245
      %1248 = vst.msk [vmem:[%s561 + $0x8] sm:$0x1] %vm609, %v1246
      %p1249 = scmp.lt.s32.totalorder %s27, 1
      %s1250 = scalar_select %p1249, %s27, 1
      %s1251 = smul.addr %s1250, 2
      %s1252 = smul.addr %s1251, 8
      %s1253 = scalar_lea.vmem %s12, %s1252
      // Predicated region
      $region73: #{transformer_forward.2} parent=67 // pred_check
        %p1254 = pneg %p350
      $region74: #{transformer_forward.2} parent=67 // pred_check_branch
        %1256 = sbr.rel (%p1254) target = $region76
      $region75: #{transformer_forward.2} parent=67 // pred_region
        _
      $region76: #{transformer_forward.2} parent=67 // pred_fallthru
        _
    $region68: #{transformer_forward.2} parent=5 // pred_fallthru
      _
    %p1257 = scmp.le.s32.totalorder 2, %s18
    // Predicated region
    $region77: #{transformer_forward.2} parent=5 // pred_check
      %p1258 = pneg %p1257
    $region78: #{transformer_forward.2} parent=5 // pred_check_branch
      %1260 = sbr.rel (%p1258) target = $region80
    $region79: #{transformer_forward.2} parent=5 // pred_region
      %s1261 = ssub.s32 %s18, 2
      // Predicated region
      $region81: #{transformer_forward.2} parent=79 // pred_check
        %p1262 = pneg %p356
      $region82: #{transformer_forward.2} parent=79 // pred_check_branch
        %1264 = sbr.rel (%p1262) target = $region84
      $region83: #{transformer_forward.2} parent=79 // pred_region
        %p1265 = scmp.lt.s32.totalorder %s29, 1
        %s1266 = scalar_select %p1265, %s29, 1
        %s1267 = smul.addr %s1266, 2
        %s1268 = smul.addr %s1267, 8
        %s1269 = scalar_lea.vmem %s12, %s1268
      $region84: #{transformer_forward.2} parent=79 // pred_fallthru
        _
    $region80: #{transformer_forward.2} parent=5 // pred_fallthru
      _
  $region6: #{transformer_forward.2} parent=0 // loop_footer
    %s22 = sadd.s32 1, %s18
  $region7: #{transformer_forward.2} parent=0 // loop_footer_branch
    %17 = sbr.rel target = $region3
  $region8: #{transformer_forward.2} parent=0 // loop_exit
    _

</llo_original>
